<compile_context>
chip_gen: v5e
topology: v5e:2x2
jax: 0.10.0
libtpu: 0.0.40
codegen_flags: <defaults>
</compile_context>

<pallas_src>
import functools

import jax
import jax.numpy as jnp
from jax.experimental import pallas as pl
from jax.experimental.pallas import tpu as pltpu

LN_EPS = 1e-5
TILE_B_MAX = 1024          # VMEM use at 1024: ~2.5 MiB peak activation + <0.5 MiB weights

H_TRUE = (600, 200, 100)   # true LayerNorm feature counts (fixed by the module)
H_PAD = (640, 256, 128)    # 128-lane padded hidden widths


def _prod(dims):
    p = 1
    for d in dims:
        p *= d
    return p


def _round_up(n, m):
    return ((n + m - 1) // m) * m


def _cdiv(a, b):
    return (a + b - 1) // b


def _generator_kernel(x_ref,
                      w1_ref, b1_ref, g1_ref, be1_ref,
                      w2_ref, b2_ref, g2_ref, be2_ref,
                      w3_ref, b3_ref, g3_ref, be3_ref,
                      w4_ref, b4_ref,
                      o_ref, *, ln_inv):
    """One (TILE_B, in_dim) batch tile of the fused, lane-padded 4-layer MLP."""

    def linear(h, w_ref, b_ref):
        # bf16 x bf16 -> f32 accumulation on the MXU; bias add in f32.
        return (jnp.dot(h.astype(w_ref.dtype), w_ref[...],
                        preferred_element_type=jnp.float32)
                + b_ref[...])

    def layernorm(h, g_ref, be_ref, inv_n):
        # Padded columns of h are exactly 0, so plain sums are correct as
        # long as we divide by the TRUE feature count (inv_n), not the padded
        # width.  One-pass variance E[h^2] - mu^2 (clamped), both reductions
        # run directly off h (no extra VPU sweep).
        mu = jnp.sum(h, axis=-1, keepdims=True) * inv_n
        ex2 = jnp.sum(h * h, axis=-1, keepdims=True) * inv_n
        var = jnp.maximum(ex2 - mu * mu, 0.0)
        # gamma/beta are zero-padded, so padded lanes come out exactly 0.
        return (h - mu) * jax.lax.rsqrt(var + LN_EPS) * g_ref[...] + be_ref[...]

    h = x_ref[...].astype(jnp.float32)
    h = jnp.maximum(layernorm(linear(h, w1_ref, b1_ref), g1_ref, be1_ref, ln_inv[0]), 0.0)
    h = jnp.maximum(layernorm(linear(h, w2_ref, b2_ref), g2_ref, be2_ref, ln_inv[1]), 0.0)
    h = jnp.maximum(layernorm(linear(h, w3_ref, b3_ref), g3_ref, be3_ref, ln_inv[2]), 0.0)
    h = linear(h, w4_ref, b4_ref)
    o_ref[...] = jax.nn.sigmoid(h).astype(o_ref.dtype)


def init_generator_params(key, attack_dim, victim_dim, dtype=jnp.float32):
    """Deterministic synthetic parameters matching the PyTorch module shapes."""
    in_dim = _prod(attack_dim) + _prod(victim_dim)
    out_dim = _prod(victim_dim)
    sizes = [(in_dim, 600), (600, 200), (200, 100), (100, out_dim)]
    params = {}
    for i, (fin, fout) in enumerate(sizes, start=1):
        key, kw, kb = jax.random.split(key, 3)
        bound = 1.0 / jnp.sqrt(fin)
        # stored as (in, out) == PyTorch weight.T
        params[f"w{i}"] = jax.random.uniform(kw, (fin, fout), dtype, -bound, bound)
        params[f"b{i}"] = jax.random.uniform(kb, (1, fout), dtype, -bound, bound)
        if i <= 3:  # LayerNorm after the first three linears (ones / zeros)
            params[f"g{i}"] = jnp.ones((1, fout), dtype)
            params[f"be{i}"] = jnp.zeros((1, fout), dtype)
    return params


def prepare_params(params):
    """ONE-TIME weight preparation (hoisted out of the forward).

    Pads hidden dims to H_PAD and the output dim to a multiple of 128 with
    zeros, zero-pads biases / gamma / beta, and casts weights to bf16
    (MXU-native, halves weight DMA).  Call once and reuse the result across
    forwards; re-running this per call would triple the weight HBM traffic.
    """
    in_dim = params["w1"].shape[0]
    out_dim = params["w4"].shape[1]
    out_pad = _round_up(out_dim, 128)
    fin_pad = (in_dim, H_PAD[0], H_PAD[1], H_PAD[2])
    fout_pad = (H_PAD[0], H_PAD[1], H_PAD[2], out_pad)

    prep = {}
    for i in range(1, 5):
        w = params[f"w{i}"]
        b = params[f"b{i}"]
        fin, fout = w.shape
        w = jnp.pad(w, ((0, fin_pad[i - 1] - fin), (0, fout_pad[i - 1] - fout)))
        b = jnp.pad(b, ((0, 0), (0, fout_pad[i - 1] - fout)))
        prep[f"w{i}"] = w.astype(jnp.bfloat16)
        prep[f"b{i}"] = b.astype(jnp.float32)
        if i <= 3:
            g = jnp.pad(params[f"g{i}"], ((0, 0), (0, fout_pad[i - 1] - fout)))
            be = jnp.pad(params[f"be{i}"], ((0, 0), (0, fout_pad[i - 1] - fout)))
            prep[f"g{i}"] = g.astype(jnp.float32)
            prep[f"be{i}"] = be.astype(jnp.float32)
    return jax.tree_util.tree_map(jax.device_put, prep)


@functools.partial(jax.jit, static_argnames=("victim_dim",))
def generator_forward(x, prepared, victim_dim):
    bs = x.shape[0]
    x2d = x.reshape(bs, -1)                    # "reshape" branch of forward
    in_dim = x2d.shape[1]
    out_dim = _prod(victim_dim)
    out_dim_pad = prepared["w4"].shape[1]      # lane-dense output stores

    # Batch tiling: pad rows to a multiple of 8 (sublane).  If everything
    # would fit into one tile, split into 2 grid steps so the "parallel"
    # batch axis can shard across both TensorCores on v7x.
    padded_bs = _round_up(bs, 8)
    if 8 < padded_bs <= TILE_B_MAX:
        tile_b = _round_up(_cdiv(padded_bs, 2), 8)
    else:
        tile_b = min(TILE_B_MAX, padded_bs)
    padded_bs = _round_up(padded_bs, tile_b)   # tiles divide the batch evenly
    if padded_bs != bs:
        x2d = jnp.pad(x2d, ((0, padded_bs - bs), (0, 0)))
    grid = (padded_bs // tile_b,)

    batch_map = lambda i: (i, 0)   # x / out march along the batch axis
    const_map = lambda i: (0, 0)   # params DMA'd once, VMEM-resident across steps

    args = [
        x2d,
        prepared["w1"], prepared["b1"], prepared["g1"], prepared["be1"],
        prepared["w2"], prepared["b2"], prepared["g2"], prepared["be2"],
        prepared["w3"], prepared["b3"], prepared["g3"], prepared["be3"],
        prepared["w4"], prepared["b4"],
    ]
    in_specs = [pl.BlockSpec((tile_b, in_dim), batch_map)]
    in_specs += [pl.BlockSpec(a.shape, const_map) for a in args[1:]]
    out_spec = pl.BlockSpec((tile_b, out_dim_pad), batch_map)

    # Advisory cost hint for XLA scheduling around the custom call.
    flops = 2 * padded_bs * (in_dim * H_PAD[0] + H_PAD[0] * H_PAD[1]
                             + H_PAD[1] * H_PAD[2] + H_PAD[2] * out_dim_pad)
    weight_bytes = sum(int(a.size) * a.dtype.itemsize for a in args[1:])
    bytes_accessed = (int(x2d.size) * x2d.dtype.itemsize
                      + weight_bytes
                      + padded_bs * out_dim_pad * 2)      # bf16 output
    cost = pl.CostEstimate(flops=int(flops),
                           transcendentals=int(padded_bs * (3 + out_dim_pad)),
                           bytes_accessed=int(bytes_accessed))

    kernel = functools.partial(
        _generator_kernel, ln_inv=tuple(1.0 / d for d in H_TRUE))

    r = pl.pallas_call(
        kernel,
        out_shape=jax.ShapeDtypeStruct((padded_bs, out_dim_pad), jnp.bfloat16),
        grid=grid,
        in_specs=in_specs,
        out_specs=out_spec,
        compiler_params=pltpu.CompilerParams(
            dimension_semantics=("parallel",)),   # megacore on v7x
        cost_estimate=cost,
    )(*args)

    # Slice off batch / lane padding; cast bf16 -> input dtype (tiny pass).
    r = r[:bs, :out_dim].astype(x.dtype)
    return r.reshape((bs,) + tuple(victim_dim))


def _reference_forward(x, params, victim_dim,
                       matmul_dtype=jnp.float32, out_dtype=jnp.float32):
    """Pure-JAX reference (matmul_dtype / out_dtype mirror the kernel path)."""
    bs = x.shape[0]
    h = x.reshape(bs, -1).astype(jnp.float32)

    def lin(h, w, b):
        return jnp.dot(h.astype(matmul_dtype), w.astype(matmul_dtype),
                       preferred_element_type=jnp.float32) + b

    def ln(h, g, b):
        mu = jnp.mean(h, axis=-1, keepdims=True)
        var = jnp.mean((h - mu) ** 2, axis=-1, keepdims=True)
        return (h - mu) / jnp.sqrt(var + LN_EPS) * g + b

    h = jnp.maximum(ln(lin(h, params["w1"], params["b1"]), params["g1"], params["be1"]), 0.0)
    h = jnp.maximum(ln(lin(h, params["w2"], params["b2"]), params["g2"], params["be2"]), 0.0)
    h = jnp.maximum(ln(lin(h, params["w3"], params["b3"]), params["g3"], params["be3"]), 0.0)
    h = jax.nn.sigmoid(lin(h, params["w4"], params["b4"]))
    h = h.astype(out_dtype).astype(jnp.float32)
    return h.reshape((bs,) + tuple(victim_dim))


if __name__ == "__main__":
    # Small shapes consistent with the module:
    #   attack_dim = (4, 8)  (prod = 32), victim_dim = (16,)  (prod = 16)
    #   => net input dim = 32 + 16 = 48, output dim = 16
    attack_dim = (4, 8)
    victim_dim = (16,)
    bs = 2
    in_dim = _prod(attack_dim) + _prod(victim_dim)

    key = jax.random.PRNGKey(0)
    key, kx = jax.random.split(key)
    x = jax.random.normal(kx, (bs, in_dim), jnp.float32)  # already-concatenated input
    params = init_generator_params(key, attack_dim, victim_dim)

    prepared = prepare_params(params)            # one-time weight prep (hoisted)
    out = generator_forward(x, prepared, victim_dim)
    out = jax.block_until_ready(out)
    assert out.shape == (bs,) + victim_dim, out.shape

    # Tight check: reference mirrors the kernel's bf16 matmuls + bf16 output
    # rounding (differences limited to LN formulation / EUP sigmoid + 1 ULP).
    ref_bf16 = _reference_forward(x, params, victim_dim,
                                  matmul_dtype=jnp.bfloat16,
                                  out_dtype=jnp.bfloat16)
    err_bf16 = float(jnp.max(jnp.abs(out - ref_bf16)))
    assert jnp.allclose(out, ref_bf16, atol=8e-3, rtol=8e-3), err_bf16

    # Looser check against the full-f32 (PyTorch-equivalent) reference.
    # Note: bf16 matmuls / bf16 output / one-pass LN variance mean the kernel
    # is not bit-exact vs. PyTorch; 3e-2 abs/rel on sigmoid outputs in [0, 1].
    ref_f32 = _reference_forward(x, params, victim_dim,
                                 matmul_dtype=jnp.float32,
                                 out_dtype=jnp.float32)
    err_f32 = float(jnp.max(jnp.abs(out - ref_f32)))
    assert jnp.allclose(out, ref_f32, atol=3e-2, rtol=3e-2), err_f32

    print("KERNEL_OK")
</pallas_src>

<mosaic_0001>
module attributes {stable_mosaic.version = 11 : i64} {
  func.func @_generator_kernel(%arg0: i32, %arg1: memref<8x48xf32, #tpu.memory_space<vmem>>, %arg2: memref<48x640xbf16, #tpu.memory_space<vmem>>, %arg3: memref<1x640xf32, #tpu.memory_space<vmem>>, %arg4: memref<1x640xf32, #tpu.memory_space<vmem>>, %arg5: memref<1x640xf32, #tpu.memory_space<vmem>>, %arg6: memref<640x256xbf16, #tpu.memory_space<vmem>>, %arg7: memref<1x256xf32, #tpu.memory_space<vmem>>, %arg8: memref<1x256xf32, #tpu.memory_space<vmem>>, %arg9: memref<1x256xf32, #tpu.memory_space<vmem>>, %arg10: memref<256x128xbf16, #tpu.memory_space<vmem>>, %arg11: memref<1x128xf32, #tpu.memory_space<vmem>>, %arg12: memref<1x128xf32, #tpu.memory_space<vmem>>, %arg13: memref<1x128xf32, #tpu.memory_space<vmem>>, %arg14: memref<128x128xbf16, #tpu.memory_space<vmem>>, %arg15: memref<1x128xf32, #tpu.memory_space<vmem>>, %arg16: memref<8x128xbf16, #tpu.memory_space<vmem>>) attributes {dimension_semantics = [#tpu.dimension_semantics<parallel>], iteration_bounds = array<i64: 1>, scalar_prefetch = 0 : i64, scratch_operands = 0 : i64, tpu.core_type = #tpu.core_type<tc>, window_params = [{transform_indices = @transform_0, window_bounds = array<i64: 8, 48>}, {pipeline_mode = #tpu.pipeline_mode<synchronous>, transform_indices = @transform_1, window_bounds = array<i64: 48, 640>}, {pipeline_mode = #tpu.pipeline_mode<synchronous>, transform_indices = @transform_2, window_bounds = array<i64: 1, 640>}, {pipeline_mode = #tpu.pipeline_mode<synchronous>, transform_indices = @transform_3, window_bounds = array<i64: 1, 640>}, {pipeline_mode = #tpu.pipeline_mode<synchronous>, transform_indices = @transform_4, window_bounds = array<i64: 1, 640>}, {pipeline_mode = #tpu.pipeline_mode<synchronous>, transform_indices = @transform_5, window_bounds = array<i64: 640, 256>}, {pipeline_mode = #tpu.pipeline_mode<synchronous>, transform_indices = @transform_6, window_bounds = array<i64: 1, 256>}, {pipeline_mode = #tpu.pipeline_mode<synchronous>, transform_indices = @transform_7, window_bounds = array<i64: 1, 256>}, {pipeline_mode = #tpu.pipeline_mode<synchronous>, transform_indices = @transform_8, window_bounds = array<i64: 1, 256>}, {pipeline_mode = #tpu.pipeline_mode<synchronous>, transform_indices = @transform_9, window_bounds = array<i64: 256, 128>}, {pipeline_mode = #tpu.pipeline_mode<synchronous>, transform_indices = @transform_10, window_bounds = array<i64: 1, 128>}, {pipeline_mode = #tpu.pipeline_mode<synchronous>, transform_indices = @transform_11, window_bounds = array<i64: 1, 128>}, {pipeline_mode = #tpu.pipeline_mode<synchronous>, transform_indices = @transform_12, window_bounds = array<i64: 1, 128>}, {pipeline_mode = #tpu.pipeline_mode<synchronous>, transform_indices = @transform_13, window_bounds = array<i64: 128, 128>}, {pipeline_mode = #tpu.pipeline_mode<synchronous>, transform_indices = @transform_14, window_bounds = array<i64: 1, 128>}, {transform_indices = @transform_15, window_bounds = array<i64: 8, 128>}]} {
    %c0 = arith.constant 0 : index
    %c0_0 = arith.constant 0 : index
    %0 = vector.load %arg1[%c0, %c0_0] : memref<8x48xf32, #tpu.memory_space<vmem>>, vector<8x48xf32>
    %1 = arith.truncf %0 : vector<8x48xf32> to vector<8x48xbf16>
    %c0_1 = arith.constant 0 : index
    %c0_2 = arith.constant 0 : index
    %2 = vector.load %arg2[%c0_1, %c0_2] : memref<48x640xbf16, #tpu.memory_space<vmem>>, vector<48x640xbf16>
    %cst = arith.constant dense<0.000000e+00> : vector<8x640xf32>
    %3 = tpu.matmul %1, %2, %cst {dimension_numbers = #tpu.dot_dimension_numbers<[1], [0], [0], [1], [0, 0, 1, 1], [], []>} : vector<8x48xbf16>, vector<48x640xbf16>, vector<8x640xf32> -> vector<8x640xf32>
    %c0_3 = arith.constant 0 : index
    %c0_4 = arith.constant 0 : index
    %4 = vector.load %arg3[%c0_3, %c0_4] : memref<1x640xf32, #tpu.memory_space<vmem>>, vector<1x640xf32>
    %5 = vector.broadcast %4 : vector<1x640xf32> to vector<8x640xf32>
    %6 = arith.addf %3, %5 : vector<8x640xf32>
    %cst_5 = arith.constant dense<0.000000e+00> : vector<8xf32>
    %7 = vector.multi_reduction <add>, %6, %cst_5 [1] : vector<8x640xf32> to vector<8xf32>
    %8 = vector.shape_cast %7 : vector<8xf32> to vector<8x1xf32>
    %cst_6 = arith.constant 0.00166666671 : f32
    %9 = vector.broadcast %cst_6 : f32 to vector<8x1xf32>
    %10 = arith.mulf %8, %9 : vector<8x1xf32>
    %11 = arith.mulf %6, %6 : vector<8x640xf32>
    %cst_7 = arith.constant dense<0.000000e+00> : vector<8xf32>
    %12 = vector.multi_reduction <add>, %11, %cst_7 [1] : vector<8x640xf32> to vector<8xf32>
    %13 = vector.shape_cast %12 : vector<8xf32> to vector<8x1xf32>
    %cst_8 = arith.constant 0.00166666671 : f32
    %14 = vector.broadcast %cst_8 : f32 to vector<8x1xf32>
    %15 = arith.mulf %13, %14 : vector<8x1xf32>
    %16 = arith.mulf %10, %10 : vector<8x1xf32>
    %17 = arith.subf %15, %16 : vector<8x1xf32>
    %cst_9 = arith.constant 0.000000e+00 : f32
    %18 = vector.broadcast %cst_9 : f32 to vector<8x1xf32>
    %19 = arith.maximumf %17, %18 : vector<8x1xf32>
    %20 = vector.broadcast %10 : vector<8x1xf32> to vector<8x640xf32>
    %21 = arith.subf %6, %20 : vector<8x640xf32>
    %cst_10 = arith.constant 9.99999974E-6 : f32
    %22 = vector.broadcast %cst_10 : f32 to vector<8x1xf32>
    %23 = arith.addf %19, %22 : vector<8x1xf32>
    %24 = math.rsqrt %23 : vector<8x1xf32>
    %25 = vector.broadcast %24 : vector<8x1xf32> to vector<8x640xf32>
    %26 = arith.mulf %21, %25 : vector<8x640xf32>
    %c0_11 = arith.constant 0 : index
    %c0_12 = arith.constant 0 : index
    %27 = vector.load %arg4[%c0_11, %c0_12] : memref<1x640xf32, #tpu.memory_space<vmem>>, vector<1x640xf32>
    %28 = vector.broadcast %27 : vector<1x640xf32> to vector<8x640xf32>
    %29 = arith.mulf %26, %28 : vector<8x640xf32>
    %c0_13 = arith.constant 0 : index
    %c0_14 = arith.constant 0 : index
    %30 = vector.load %arg5[%c0_13, %c0_14] : memref<1x640xf32, #tpu.memory_space<vmem>>, vector<1x640xf32>
    %31 = vector.broadcast %30 : vector<1x640xf32> to vector<8x640xf32>
    %32 = arith.addf %29, %31 : vector<8x640xf32>
    %cst_15 = arith.constant 0.000000e+00 : f32
    %33 = vector.broadcast %cst_15 : f32 to vector<8x640xf32>
    %34 = arith.maximumf %32, %33 : vector<8x640xf32>
    %35 = arith.truncf %34 : vector<8x640xf32> to vector<8x640xbf16>
    %c0_16 = arith.constant 0 : index
    %c0_17 = arith.constant 0 : index
    %36 = vector.load %arg6[%c0_16, %c0_17] : memref<640x256xbf16, #tpu.memory_space<vmem>>, vector<640x256xbf16>
    %cst_18 = arith.constant dense<0.000000e+00> : vector<8x256xf32>
    %37 = tpu.matmul %35, %36, %cst_18 {dimension_numbers = #tpu.dot_dimension_numbers<[1], [0], [0], [1], [0, 0, 1, 1], [], []>} : vector<8x640xbf16>, vector<640x256xbf16>, vector<8x256xf32> -> vector<8x256xf32>
    %c0_19 = arith.constant 0 : index
    %c0_20 = arith.constant 0 : index
    %38 = vector.load %arg7[%c0_19, %c0_20] : memref<1x256xf32, #tpu.memory_space<vmem>>, vector<1x256xf32>
    %39 = vector.broadcast %38 : vector<1x256xf32> to vector<8x256xf32>
    %40 = arith.addf %37, %39 : vector<8x256xf32>
    %cst_21 = arith.constant dense<0.000000e+00> : vector<8xf32>
    %41 = vector.multi_reduction <add>, %40, %cst_21 [1] : vector<8x256xf32> to vector<8xf32>
    %42 = vector.shape_cast %41 : vector<8xf32> to vector<8x1xf32>
    %cst_22 = arith.constant 5.000000e-03 : f32
    %43 = vector.broadcast %cst_22 : f32 to vector<8x1xf32>
    %44 = arith.mulf %42, %43 : vector<8x1xf32>
    %45 = arith.mulf %40, %40 : vector<8x256xf32>
    %cst_23 = arith.constant dense<0.000000e+00> : vector<8xf32>
    %46 = vector.multi_reduction <add>, %45, %cst_23 [1] : vector<8x256xf32> to vector<8xf32>
    %47 = vector.shape_cast %46 : vector<8xf32> to vector<8x1xf32>
    %cst_24 = arith.constant 5.000000e-03 : f32
    %48 = vector.broadcast %cst_24 : f32 to vector<8x1xf32>
    %49 = arith.mulf %47, %48 : vector<8x1xf32>
    %50 = arith.mulf %44, %44 : vector<8x1xf32>
    %51 = arith.subf %49, %50 : vector<8x1xf32>
    %cst_25 = arith.constant 0.000000e+00 : f32
    %52 = vector.broadcast %cst_25 : f32 to vector<8x1xf32>
    %53 = arith.maximumf %51, %52 : vector<8x1xf32>
    %54 = vector.broadcast %44 : vector<8x1xf32> to vector<8x256xf32>
    %55 = arith.subf %40, %54 : vector<8x256xf32>
    %cst_26 = arith.constant 9.99999974E-6 : f32
    %56 = vector.broadcast %cst_26 : f32 to vector<8x1xf32>
    %57 = arith.addf %53, %56 : vector<8x1xf32>
    %58 = math.rsqrt %57 : vector<8x1xf32>
    %59 = vector.broadcast %58 : vector<8x1xf32> to vector<8x256xf32>
    %60 = arith.mulf %55, %59 : vector<8x256xf32>
    %c0_27 = arith.constant 0 : index
    %c0_28 = arith.constant 0 : index
    %61 = vector.load %arg8[%c0_27, %c0_28] : memref<1x256xf32, #tpu.memory_space<vmem>>, vector<1x256xf32>
    %62 = vector.broadcast %61 : vector<1x256xf32> to vector<8x256xf32>
    %63 = arith.mulf %60, %62 : vector<8x256xf32>
    %c0_29 = arith.constant 0 : index
    %c0_30 = arith.constant 0 : index
    %64 = vector.load %arg9[%c0_29, %c0_30] : memref<1x256xf32, #tpu.memory_space<vmem>>, vector<1x256xf32>
    %65 = vector.broadcast %64 : vector<1x256xf32> to vector<8x256xf32>
    %66 = arith.addf %63, %65 : vector<8x256xf32>
    %cst_31 = arith.constant 0.000000e+00 : f32
    %67 = vector.broadcast %cst_31 : f32 to vector<8x256xf32>
    %68 = arith.maximumf %66, %67 : vector<8x256xf32>
    %69 = arith.truncf %68 : vector<8x256xf32> to vector<8x256xbf16>
    %c0_32 = arith.constant 0 : index
    %c0_33 = arith.constant 0 : index
    %70 = vector.load %arg10[%c0_32, %c0_33] : memref<256x128xbf16, #tpu.memory_space<vmem>>, vector<256x128xbf16>
    %cst_34 = arith.constant dense<0.000000e+00> : vector<8x128xf32>
    %71 = tpu.matmul %69, %70, %cst_34 {dimension_numbers = #tpu.dot_dimension_numbers<[1], [0], [0], [1], [0, 0, 1, 1], [], []>} : vector<8x256xbf16>, vector<256x128xbf16>, vector<8x128xf32> -> vector<8x128xf32>
    %c0_35 = arith.constant 0 : index
    %c0_36 = arith.constant 0 : index
    %72 = vector.load %arg11[%c0_35, %c0_36] : memref<1x128xf32, #tpu.memory_space<vmem>>, vector<1x128xf32>
    %73 = vector.broadcast %72 : vector<1x128xf32> to vector<8x128xf32>
    %74 = arith.addf %71, %73 : vector<8x128xf32>
    %cst_37 = arith.constant dense<0.000000e+00> : vector<8xf32>
    %75 = vector.multi_reduction <add>, %74, %cst_37 [1] : vector<8x128xf32> to vector<8xf32>
    %76 = vector.shape_cast %75 : vector<8xf32> to vector<8x1xf32>
    %cst_38 = arith.constant 0.00999999977 : f32
    %77 = vector.broadcast %cst_38 : f32 to vector<8x1xf32>
    %78 = arith.mulf %76, %77 : vector<8x1xf32>
    %79 = arith.mulf %74, %74 : vector<8x128xf32>
    %cst_39 = arith.constant dense<0.000000e+00> : vector<8xf32>
    %80 = vector.multi_reduction <add>, %79, %cst_39 [1] : vector<8x128xf32> to vector<8xf32>
    %81 = vector.shape_cast %80 : vector<8xf32> to vector<8x1xf32>
    %cst_40 = arith.constant 0.00999999977 : f32
    %82 = vector.broadcast %cst_40 : f32 to vector<8x1xf32>
    %83 = arith.mulf %81, %82 : vector<8x1xf32>
    %84 = arith.mulf %78, %78 : vector<8x1xf32>
    %85 = arith.subf %83, %84 : vector<8x1xf32>
    %cst_41 = arith.constant 0.000000e+00 : f32
    %86 = vector.broadcast %cst_41 : f32 to vector<8x1xf32>
    %87 = arith.maximumf %85, %86 : vector<8x1xf32>
    %88 = vector.broadcast %78 : vector<8x1xf32> to vector<8x128xf32>
    %89 = arith.subf %74, %88 : vector<8x128xf32>
    %cst_42 = arith.constant 9.99999974E-6 : f32
    %90 = vector.broadcast %cst_42 : f32 to vector<8x1xf32>
    %91 = arith.addf %87, %90 : vector<8x1xf32>
    %92 = math.rsqrt %91 : vector<8x1xf32>
    %93 = vector.broadcast %92 : vector<8x1xf32> to vector<8x128xf32>
    %94 = arith.mulf %89, %93 : vector<8x128xf32>
    %c0_43 = arith.constant 0 : index
    %c0_44 = arith.constant 0 : index
    %95 = vector.load %arg12[%c0_43, %c0_44] : memref<1x128xf32, #tpu.memory_space<vmem>>, vector<1x128xf32>
    %96 = vector.broadcast %95 : vector<1x128xf32> to vector<8x128xf32>
    %97 = arith.mulf %94, %96 : vector<8x128xf32>
    %c0_45 = arith.constant 0 : index
    %c0_46 = arith.constant 0 : index
    %98 = vector.load %arg13[%c0_45, %c0_46] : memref<1x128xf32, #tpu.memory_space<vmem>>, vector<1x128xf32>
    %99 = vector.broadcast %98 : vector<1x128xf32> to vector<8x128xf32>
    %100 = arith.addf %97, %99 : vector<8x128xf32>
    %cst_47 = arith.constant 0.000000e+00 : f32
    %101 = vector.broadcast %cst_47 : f32 to vector<8x128xf32>
    %102 = arith.maximumf %100, %101 : vector<8x128xf32>
    %103 = arith.truncf %102 : vector<8x128xf32> to vector<8x128xbf16>
    %c0_48 = arith.constant 0 : index
    %c0_49 = arith.constant 0 : index
    %104 = vector.load %arg14[%c0_48, %c0_49] : memref<128x128xbf16, #tpu.memory_space<vmem>>, vector<128x128xbf16>
    %cst_50 = arith.constant dense<0.000000e+00> : vector<8x128xf32>
    %105 = tpu.matmul %103, %104, %cst_50 {dimension_numbers = #tpu.dot_dimension_numbers<[1], [0], [0], [1], [0, 0, 1, 1], [], []>} : vector<8x128xbf16>, vector<128x128xbf16>, vector<8x128xf32> -> vector<8x128xf32>
    %c0_51 = arith.constant 0 : index
    %c0_52 = arith.constant 0 : index
    %106 = vector.load %arg15[%c0_51, %c0_52] : memref<1x128xf32, #tpu.memory_space<vmem>>, vector<1x128xf32>
    %107 = vector.broadcast %106 : vector<1x128xf32> to vector<8x128xf32>
    %108 = arith.addf %105, %107 : vector<8x128xf32>
    %109 = arith.negf %108 : vector<8x128xf32>
    %110 = math.exp %109 : vector<8x128xf32>
    %cst_53 = arith.constant 1.000000e+00 : f32
    %111 = vector.broadcast %cst_53 : f32 to vector<8x128xf32>
    %112 = arith.addf %111, %110 : vector<8x128xf32>
    %113 = arith.divf %111, %112 : vector<8x128xf32>
    %114 = arith.truncf %113 : vector<8x128xf32> to vector<8x128xbf16>
    %c0_54 = arith.constant 0 : index
    %c0_55 = arith.constant 0 : index
    %115 = vector.load %arg16[%c0_54, %c0_55] : memref<8x128xbf16, #tpu.memory_space<vmem>>, vector<8x128xbf16>
    tpu.vector_store %arg16[%c0_54, %c0_55], %114 {strides = array<i32>} : memref<8x128xbf16, #tpu.memory_space<vmem>>, vector<8x128xbf16>,
    return
  }
  func.func @transform_0(%arg0: i32) -> (i32, i32) {
    %c0_i32 = arith.constant 0 : i32
    %c0_i32_0 = arith.constant 0 : i32
    return %arg0, %c0_i32 : i32, i32
  }
  func.func @transform_1(%arg0: i32) -> (i32, i32) {
    %c0_i32 = arith.constant 0 : i32
    %c0_i32_0 = arith.constant 0 : i32
    %c0_i32_1 = arith.constant 0 : i32
    return %c0_i32, %c0_i32_0 : i32, i32
  }
  func.func @transform_2(%arg0: i32) -> (i32, i32) {
    %c0_i32 = arith.constant 0 : i32
    %c0_i32_0 = arith.constant 0 : i32
    %c0_i32_1 = arith.constant 0 : i32
    return %c0_i32, %c0_i32_0 : i32, i32
  }
  func.func @transform_3(%arg0: i32) -> (i32, i32) {
    %c0_i32 = arith.constant 0 : i32
    %c0_i32_0 = arith.constant 0 : i32
    %c0_i32_1 = arith.constant 0 : i32
    return %c0_i32, %c0_i32_0 : i32, i32
  }
  func.func @transform_4(%arg0: i32) -> (i32, i32) {
    %c0_i32 = arith.constant 0 : i32
    %c0_i32_0 = arith.constant 0 : i32
    %c0_i32_1 = arith.constant 0 : i32
    return %c0_i32, %c0_i32_0 : i32, i32
  }
  func.func @transform_5(%arg0: i32) -> (i32, i32) {
    %c0_i32 = arith.constant 0 : i32
    %c0_i32_0 = arith.constant 0 : i32
    %c0_i32_1 = arith.constant 0 : i32
    return %c0_i32, %c0_i32_0 : i32, i32
  }
  func.func @transform_6(%arg0: i32) -> (i32, i32) {
    %c0_i32 = arith.constant 0 : i32
    %c0_i32_0 = arith.constant 0 : i32
    %c0_i32_1 = arith.constant 0 : i32
    return %c0_i32, %c0_i32_0 : i32, i32
  }
  func.func @transform_7(%arg0: i32) -> (i32, i32) {
    %c0_i32 = arith.constant 0 : i32
    %c0_i32_0 = arith.constant 0 : i32
    %c0_i32_1 = arith.constant 0 : i32
    return %c0_i32, %c0_i32_0 : i32, i32
  }
  func.func @transform_8(%arg0: i32) -> (i32, i32) {
    %c0_i32 = arith.constant 0 : i32
    %c0_i32_0 = arith.constant 0 : i32
    %c0_i32_1 = arith.constant 0 : i32
    return %c0_i32, %c0_i32_0 : i32, i32
  }
  func.func @transform_9(%arg0: i32) -> (i32, i32) {
    %c0_i32 = arith.constant 0 : i32
    %c0_i32_0 = arith.constant 0 : i32
    %c0_i32_1 = arith.constant 0 : i32
    return %c0_i32, %c0_i32_0 : i32, i32
  }
  func.func @transform_10(%arg0: i32) -> (i32, i32) {
    %c0_i32 = arith.constant 0 : i32
    %c0_i32_0 = arith.constant 0 : i32
    %c0_i32_1 = arith.constant 0 : i32
    return %c0_i32, %c0_i32_0 : i32, i32
  }
  func.func @transform_11(%arg0: i32) -> (i32, i32) {
    %c0_i32 = arith.constant 0 : i32
    %c0_i32_0 = arith.constant 0 : i32
    %c0_i32_1 = arith.constant 0 : i32
    return %c0_i32, %c0_i32_0 : i32, i32
  }
  func.func @transform_12(%arg0: i32) -> (i32, i32) {
    %c0_i32 = arith.constant 0 : i32
    %c0_i32_0 = arith.constant 0 : i32
    %c0_i32_1 = arith.constant 0 : i32
    return %c0_i32, %c0_i32_0 : i32, i32
  }
  func.func @transform_13(%arg0: i32) -> (i32, i32) {
    %c0_i32 = arith.constant 0 : i32
    %c0_i32_0 = arith.constant 0 : i32
    %c0_i32_1 = arith.constant 0 : i32
    return %c0_i32, %c0_i32_0 : i32, i32
  }
  func.func @transform_14(%arg0: i32) -> (i32, i32) {
    %c0_i32 = arith.constant 0 : i32
    %c0_i32_0 = arith.constant 0 : i32
    %c0_i32_1 = arith.constant 0 : i32
    return %c0_i32, %c0_i32_0 : i32, i32
  }
  func.func @transform_15(%arg0: i32) -> (i32, i32) {
    %c0_i32 = arith.constant 0 : i32
    %c0_i32_0 = arith.constant 0 : i32
    return %arg0, %c0_i32 : i32, i32
  }
}

</mosaic_0001>

<llo_original>
// kernel: generator_forward.1
$region0: #{generator_forward.1}
  #allocation0 [shape = 'u32[]', space=smem, size = 0x4, offset = 0x4, fixed_abs, tag = 'smem constant byte address 0x4 - core index']
  #allocation1 [shape = 'u32[72,128]{1,0:T(1,128)}', space=vmem, size = 0x9000, scoped, tag = 'internal scratch']
  %s0 = inlined_call_operand.vmem [shape: f32[8,48], index: 0, kind: input, shape index: {}]
  %s1 = inlined_call_operand.hbm [shape: bf16[48,640], index: 1, kind: input, shape index: {}]
  %s2 = inlined_call_operand.vmem [shape: f32[1,640], index: 2, kind: input, shape index: {}]
  %s3 = inlined_call_operand.vmem [shape: f32[1,640], index: 3, kind: input, shape index: {}]
  %s4 = inlined_call_operand.vmem [shape: f32[1,640], index: 4, kind: input, shape index: {}]
  %s5 = inlined_call_operand.hbm [shape: bf16[640,256], index: 5, kind: input, shape index: {}]
  %s6 = inlined_call_operand.hbm [shape: f32[1,256], index: 6, kind: input, shape index: {}]
  %s7 = inlined_call_operand.vmem [shape: f32[1,256], index: 7, kind: input, shape index: {}]
  %s8 = inlined_call_operand.hbm [shape: f32[1,256], index: 8, kind: input, shape index: {}]
  %s9 = inlined_call_operand.hbm [shape: bf16[256,128], index: 9, kind: input, shape index: {}]
  %s10 = inlined_call_operand.hbm [shape: f32[1,128], index: 10, kind: input, shape index: {}]
  %s11 = inlined_call_operand.vmem [shape: f32[1,128], index: 11, kind: input, shape index: {}]
  %s12 = inlined_call_operand.hbm [shape: f32[1,128], index: 12, kind: input, shape index: {}]
  %s13 = inlined_call_operand.hbm [shape: bf16[128,128], index: 13, kind: input, shape index: {}]
  %s14 = inlined_call_operand.hbm [shape: f32[1,128], index: 14, kind: input, shape index: {}]
  %s15 = inlined_call_operand.vmem [shape: bf16[8,128], index: 15, kind: output, shape index: {}]
  %s16 = sld [smem:[#allocation0]]
  $region106: #{generator_forward.1} parent=0
    _
  %s18 = ssub.s32 1, %s16
  %s19 = scalar_select 0, %s18, %s16
  $region1: #{generator_forward.1} parent=0
    #allocation2 [shape = 'u8[61440]{0}', space=vmem, size = 0xf000, scoped, tag = 'input window, operand 1, single buffered']
    #allocation3 [shape = 's32[1]{0}', space=sflag, size = 0x4, scoped, tag = 'scoped memory for generator_forward.1']
    #allocation4 [shape = 'u8[327680]{0}', space=vmem, size = 0x50000, scoped, tag = 'input window, operand 5, single buffered']
    #allocation5 [shape = 's32[1]{0}', space=sflag, size = 0x4, scoped, tag = 'scoped memory for generator_forward.1']
    #allocation6 [shape = 'u8[1024]{0}', space=vmem, size = 0x400, scoped, tag = 'input window, operand 6, single buffered']
    #allocation7 [shape = 'u8[1024]{0}', space=vmem, size = 0x400, scoped, tag = 'input window, operand 8, single buffered']
    #allocation8 [shape = 's32[1]{0}', space=sflag, size = 0x4, scoped, tag = 'scoped memory for generator_forward.1']
    #allocation9 [shape = 'u8[65536]{0}', space=vmem, size = 0x10000, scoped, tag = 'input window, operand 9, single buffered']
    #allocation10 [shape = 'u8[512]{0}', space=vmem, size = 0x400, scoped, tag = 'input window, operand 10, single buffered']
    #allocation11 [shape = 's32[1]{0}', space=sflag, size = 0x4, scoped, tag = 'scoped memory for generator_forward.1']
    #allocation12 [shape = 'u8[512]{0}', space=vmem, size = 0x400, scoped, tag = 'input window, operand 12, single buffered']
    #allocation13 [shape = 'u8[32768]{0}', space=vmem, size = 0x8000, scoped, tag = 'input window, operand 13, single buffered']
    #allocation14 [shape = 's32[1]{0}', space=sflag, size = 0x4, scoped, tag = 'scoped memory for generator_forward.1']
    #allocation15 [shape = 'u8[512]{0}', space=vmem, size = 0x400, scoped, tag = 'input window, operand 14, single buffered']
    %20 = vsyncpa [#allocation3], 0
    %21 = vsyncpa [#allocation5], 0
    %22 = vsyncpa [#allocation8], 0
    %23 = vsyncpa [#allocation11], 0
    %24 = vsyncpa [#allocation14], 0
    // Predicated region
    $region2: #{generator_forward.1} parent=1 // pred_check
      _
    $region3: #{generator_forward.1} parent=1 // pred_check_branch
      %26 = sbr.rel (0) target = $region5
    $region4: #{generator_forward.1} parent=1 // pred_region
      _
    $region5: #{generator_forward.1} parent=1 // pred_fallthru
      _
    // Predicated region
    $region6: #{generator_forward.1} parent=1 // pred_check
      _
    $region7: #{generator_forward.1} parent=1 // pred_check_branch
      %28 = sbr.rel (0) target = $region9
    $region8: #{generator_forward.1} parent=1 // pred_region
      %30 = vsyncadd [#allocation3], 0
      %s31 = sshll.u32 %s1, 4
      %s32 = int_to_ptr.hbm [resolvable:$true] %s31
      %s33 = sshll.u32 [#allocation2], 4
      %s34 = int_to_ptr.vmem [resolvable:$true] %s33
      %39 = dma.hbm_to_vmem [thread:$0]  %s32, 1920, %s34, [#allocation3], 320, 320, 20
    $region9: #{generator_forward.1} parent=1 // pred_fallthru
      _
    // Predicated region
    $region10: #{generator_forward.1} parent=1 // pred_check
      _
    $region11: #{generator_forward.1} parent=1 // pred_check_branch
      %41 = sbr.rel (0) target = $region13
    $region12: #{generator_forward.1} parent=1 // pred_region
      _
    $region13: #{generator_forward.1} parent=1 // pred_fallthru
      _
    // Predicated region
    $region14: #{generator_forward.1} parent=1 // pred_check
      _
    $region15: #{generator_forward.1} parent=1 // pred_check_branch
      %43 = sbr.rel (0) target = $region17
    $region16: #{generator_forward.1} parent=1 // pred_region
      _
    $region17: #{generator_forward.1} parent=1 // pred_fallthru
      _
    // Predicated region
    $region18: #{generator_forward.1} parent=1 // pred_check
      _
    $region19: #{generator_forward.1} parent=1 // pred_check_branch
      %45 = sbr.rel (0) target = $region21
    $region20: #{generator_forward.1} parent=1 // pred_region
      _
    $region21: #{generator_forward.1} parent=1 // pred_fallthru
      _
    // Predicated region
    $region22: #{generator_forward.1} parent=1 // pred_check
      _
    $region23: #{generator_forward.1} parent=1 // pred_check_branch
      %47 = sbr.rel (0) target = $region25
    $region24: #{generator_forward.1} parent=1 // pred_region
      %49 = vsyncadd [#allocation5], 0
      %s50 = sshll.u32 %s5, 4
      %s51 = int_to_ptr.hbm [resolvable:$true] %s50
      %s52 = sshll.u32 [#allocation4], 4
      %s53 = int_to_ptr.vmem [resolvable:$true] %s52
      %58 = dma.hbm_to_vmem [thread:$0]  %s51, 10240, %s53, [#allocation5], 128, 128, 8
    $region25: #{generator_forward.1} parent=1 // pred_fallthru
      _
    // Predicated region
    $region26: #{generator_forward.1} parent=1 // pred_check
      _
    $region27: #{generator_forward.1} parent=1 // pred_check_branch
      %60 = sbr.rel (0) target = $region29
    $region28: #{generator_forward.1} parent=1 // pred_region
      %62 = vsyncadd [#allocation5], 0
      %s64 = sshll.u32 %s6, 4
      %s65 = int_to_ptr.hbm [resolvable:$true] %s64
      %s66 = sshll.u32 [#allocation6], 4
      %s67 = int_to_ptr.vmem [resolvable:$true] %s66
      %69 = dma.hbm_to_vmem [thread:$0]  %s65, 32, %s67, [#allocation5]
    $region29: #{generator_forward.1} parent=1 // pred_fallthru
      _
    // Predicated region
    $region30: #{generator_forward.1} parent=1 // pred_check
      _
    $region31: #{generator_forward.1} parent=1 // pred_check_branch
      %71 = sbr.rel (0) target = $region33
    $region32: #{generator_forward.1} parent=1 // pred_region
      _
    $region33: #{generator_forward.1} parent=1 // pred_fallthru
      _
    // Predicated region
    $region34: #{generator_forward.1} parent=1 // pred_check
      _
    $region35: #{generator_forward.1} parent=1 // pred_check_branch
      %73 = sbr.rel (0) target = $region37
    $region36: #{generator_forward.1} parent=1 // pred_region
      %75 = vsyncadd [#allocation8], 0
      %s77 = sshll.u32 %s8, 4
      %s78 = int_to_ptr.hbm [resolvable:$true] %s77
      %s79 = sshll.u32 [#allocation7], 4
      %s80 = int_to_ptr.vmem [resolvable:$true] %s79
      %82 = dma.hbm_to_vmem [thread:$0]  %s78, 32, %s80, [#allocation8]
    $region37: #{generator_forward.1} parent=1 // pred_fallthru
      _
    // Predicated region
    $region38: #{generator_forward.1} parent=1 // pred_check
      _
    $region39: #{generator_forward.1} parent=1 // pred_check_branch
      %84 = sbr.rel (0) target = $region41
    $region40: #{generator_forward.1} parent=1 // pred_region
      %86 = vsyncadd [#allocation8], 0
      %s87 = sshll.u32 %s9, 4
      %s88 = int_to_ptr.hbm [resolvable:$true] %s87
      %s89 = sshll.u32 [#allocation9], 4
      %s90 = int_to_ptr.vmem [resolvable:$true] %s89
      %95 = dma.hbm_to_vmem [thread:$0]  %s88, 2048, %s90, [#allocation8], 64, 64, 4
    $region41: #{generator_forward.1} parent=1 // pred_fallthru
      _
    // Predicated region
    $region42: #{generator_forward.1} parent=1 // pred_check
      _
    $region43: #{generator_forward.1} parent=1 // pred_check_branch
      %97 = sbr.rel (0) target = $region45
    $region44: #{generator_forward.1} parent=1 // pred_region
      %99 = vsyncadd [#allocation11], 0
      %s101 = sshll.u32 %s10, 4
      %s102 = int_to_ptr.hbm [resolvable:$true] %s101
      %s103 = sshll.u32 [#allocation10], 4
      %s104 = int_to_ptr.vmem [resolvable:$true] %s103
      %106 = dma.hbm_to_vmem [thread:$0]  %s102, 16, %s104, [#allocation11]
    $region45: #{generator_forward.1} parent=1 // pred_fallthru
      _
    // Predicated region
    $region46: #{generator_forward.1} parent=1 // pred_check
      _
    $region47: #{generator_forward.1} parent=1 // pred_check_branch
      %108 = sbr.rel (0) target = $region49
    $region48: #{generator_forward.1} parent=1 // pred_region
      _
    $region49: #{generator_forward.1} parent=1 // pred_fallthru
      _
    // Predicated region
    $region50: #{generator_forward.1} parent=1 // pred_check
      _
    $region51: #{generator_forward.1} parent=1 // pred_check_branch
      %110 = sbr.rel (0) target = $region53
    $region52: #{generator_forward.1} parent=1 // pred_region
      %112 = vsyncadd [#allocation11], 0
      %s114 = sshll.u32 %s12, 4
      %s115 = int_to_ptr.hbm [resolvable:$true] %s114
      %s116 = sshll.u32 [#allocation12], 4
      %s117 = int_to_ptr.vmem [resolvable:$true] %s116
      %119 = dma.hbm_to_vmem [thread:$0]  %s115, 16, %s117, [#allocation11]
    $region53: #{generator_forward.1} parent=1 // pred_fallthru
      _
    // Predicated region
    $region54: #{generator_forward.1} parent=1 // pred_check
      _
    $region55: #{generator_forward.1} parent=1 // pred_check_branch
      %121 = sbr.rel (0) target = $region57
    $region56: #{generator_forward.1} parent=1 // pred_region
      %123 = vsyncadd [#allocation14], 0
      %s124 = sshll.u32 %s13, 4
      %s125 = int_to_ptr.hbm [resolvable:$true] %s124
      %s126 = sshll.u32 [#allocation13], 4
      %s127 = int_to_ptr.vmem [resolvable:$true] %s126
      %132 = dma.hbm_to_vmem [thread:$0]  %s125, 1024, %s127, [#allocation14], 64, 64, 4
    $region57: #{generator_forward.1} parent=1 // pred_fallthru
      _
    // Predicated region
    $region58: #{generator_forward.1} parent=1 // pred_check
      _
    $region59: #{generator_forward.1} parent=1 // pred_check_branch
      %134 = sbr.rel (0) target = $region61
    $region60: #{generator_forward.1} parent=1 // pred_region
      %136 = vsyncadd [#allocation14], 0
      %s138 = sshll.u32 %s14, 4
      %s139 = int_to_ptr.hbm [resolvable:$true] %s138
      %s140 = sshll.u32 [#allocation15], 4
      %s141 = int_to_ptr.vmem [resolvable:$true] %s140
      %143 = dma.hbm_to_vmem [thread:$0]  %s139, 16, %s141, [#allocation14]
    $region61: #{generator_forward.1} parent=1 // pred_fallthru
      _
    // Predicated region
    $region62: #{generator_forward.1} parent=1 // pred_check
      _
    $region63: #{generator_forward.1} parent=1 // pred_check_branch
      %145 = sbr.rel (0) target = $region65
    $region64: #{generator_forward.1} parent=1 // pred_region
      %147 = dma.done [#allocation3], 1920
    $region65: #{generator_forward.1} parent=1 // pred_fallthru
      _
    // Predicated region
    $region66: #{generator_forward.1} parent=1 // pred_check
      _
    $region67: #{generator_forward.1} parent=1 // pred_check_branch
      %149 = sbr.rel (0) target = $region69
    $region68: #{generator_forward.1} parent=1 // pred_region
      %151 = dma.done [#allocation5], 10240
    $region69: #{generator_forward.1} parent=1 // pred_fallthru
      _
    // Predicated region
    $region70: #{generator_forward.1} parent=1 // pred_check
      _
    $region71: #{generator_forward.1} parent=1 // pred_check_branch
      %153 = sbr.rel (0) target = $region73
    $region72: #{generator_forward.1} parent=1 // pred_region
      %155 = dma.done [#allocation5], 32
    $region73: #{generator_forward.1} parent=1 // pred_fallthru
      _
    // Predicated region
    $region74: #{generator_forward.1} parent=1 // pred_check
      _
    $region75: #{generator_forward.1} parent=1 // pred_check_branch
      %157 = sbr.rel (0) target = $region77
    $region76: #{generator_forward.1} parent=1 // pred_region
      %159 = dma.done [#allocation8], 32
    $region77: #{generator_forward.1} parent=1 // pred_fallthru
      _
    // Predicated region
    $region78: #{generator_forward.1} parent=1 // pred_check
      _
    $region79: #{generator_forward.1} parent=1 // pred_check_branch
      %161 = sbr.rel (0) target = $region81
    $region80: #{generator_forward.1} parent=1 // pred_region
      %163 = dma.done [#allocation8], 2048
    $region81: #{generator_forward.1} parent=1 // pred_fallthru
      _
    // Predicated region
    $region82: #{generator_forward.1} parent=1 // pred_check
      _
    $region83: #{generator_forward.1} parent=1 // pred_check_branch
      %165 = sbr.rel (0) target = $region85
    $region84: #{generator_forward.1} parent=1 // pred_region
      %167 = dma.done [#allocation11], 16
    $region85: #{generator_forward.1} parent=1 // pred_fallthru
      _
    // Predicated region
    $region86: #{generator_forward.1} parent=1 // pred_check
      _
    $region87: #{generator_forward.1} parent=1 // pred_check_branch
      %169 = sbr.rel (0) target = $region89
    $region88: #{generator_forward.1} parent=1 // pred_region
      %171 = dma.done [#allocation11], 16
    $region89: #{generator_forward.1} parent=1 // pred_fallthru
      _
    // Predicated region
    $region90: #{generator_forward.1} parent=1 // pred_check
      _
    $region91: #{generator_forward.1} parent=1 // pred_check_branch
      %173 = sbr.rel (0) target = $region93
    $region92: #{generator_forward.1} parent=1 // pred_region
      %175 = dma.done [#allocation14], 1024
    $region93: #{generator_forward.1} parent=1 // pred_fallthru
      _
    // Predicated region
    $region94: #{generator_forward.1} parent=1 // pred_check
      _
    $region95: #{generator_forward.1} parent=1 // pred_check_branch
      %177 = sbr.rel (0) target = $region97
    $region96: #{generator_forward.1} parent=1 // pred_region
      %179 = dma.done [#allocation14], 16
    $region97: #{generator_forward.1} parent=1 // pred_fallthru
      _
    %v181 = vld [vmem:[%s0] sm:$0xff]
    %v182 = vpack.c.bf16 %v181, %v181
    %v183 = vld [vmem:[#allocation2] sm:$0xff]
    %v184 = vld [vmem:[#allocation2 + $0x8] sm:$0xff]
    %v185 = vld [vmem:[#allocation2 + $0x10] sm:$0xf]
    %v186 = vld [vmem:[#allocation2 + $0x14] sm:$0xff]
    %v187 = vld [vmem:[#allocation2 + $0x1c] sm:$0xff]
    %v188 = vld [vmem:[#allocation2 + $0x24] sm:$0xf]
    %v189 = vld [vmem:[#allocation2 + $0x28] sm:$0xff]
    %v190 = vld [vmem:[#allocation2 + $0x30] sm:$0xff]
    %v191 = vld [vmem:[#allocation2 + $0x38] sm:$0xf]
    %v192 = vld [vmem:[#allocation2 + $0x3c] sm:$0xff]
    %v193 = vld [vmem:[#allocation2 + $0x44] sm:$0xff]
    %v194 = vld [vmem:[#allocation2 + $0x4c] sm:$0xf]
    %v195 = vld [vmem:[#allocation2 + $0x50] sm:$0xff]
    %v196 = vld [vmem:[#allocation2 + $0x58] sm:$0xff]
    %v197 = vld [vmem:[#allocation2 + $0x60] sm:$0xf]
    %v198 = vld [vmem:[#allocation2 + $0x64] sm:$0xff]
    %v199 = vld [vmem:[#allocation2 + $0x6c] sm:$0xff]
    %v200 = vld [vmem:[#allocation2 + $0x74] sm:$0xf]
    %v201 = vld [vmem:[%s2] sm:$0x1f]
    %v203 = vperm.slane %v201, 0
    %v204 = vperm.slane %v201, 1
    %v205 = vperm.slane %v201, 2
    %v206 = vperm.slane %v201, 3
    %v207 = vperm.slane %v201, 4
    %v231 = vunpack.c.l.b16 %v183
    %v232 = vunpack.c.h.b16 %v183
    %v233 = vunpack.c.l.b16 %v184
    %v234 = vunpack.c.h.b16 %v184
    %v235 = vunpack.c.l.b16 %v185
    %v236 = vunpack.c.l.b16 %v186
    %v237 = vunpack.c.h.b16 %v186
    %v238 = vunpack.c.l.b16 %v187
    %v239 = vunpack.c.h.b16 %v187
    %v240 = vunpack.c.l.b16 %v188
    %v241 = vunpack.c.l.b16 %v189
    %v242 = vunpack.c.h.b16 %v189
    %v243 = vunpack.c.l.b16 %v190
    %v244 = vunpack.c.h.b16 %v190
    %v245 = vunpack.c.l.b16 %v191
    %v246 = vunpack.c.l.b16 %v192
    %v247 = vunpack.c.h.b16 %v192
    %v248 = vunpack.c.l.b16 %v193
    %v249 = vunpack.c.h.b16 %v193
    %v250 = vunpack.c.l.b16 %v194
    %v251 = vunpack.c.l.b16 %v195
    %v252 = vunpack.c.h.b16 %v195
    %v253 = vunpack.c.l.b16 %v196
    %v254 = vunpack.c.h.b16 %v196
    %v255 = vunpack.c.l.b16 %v197
    %v256 = vunpack.c.l.b16 %v198
    %v257 = vunpack.c.h.b16 %v198
    %v258 = vunpack.c.l.b16 %v199
    %v259 = vunpack.c.h.b16 %v199
    %v260 = vunpack.c.l.b16 %v200
    %v261 = vpack.c.b16 %v236, %v231
    %v262 = vpack.c.b16 %v237, %v232
    %v263 = vpack.c.b16 %v238, %v233
    %v264 = vpack.c.b16 %v239, %v234
    %v265 = vpack.c.b16 %v240, %v235
    %v266 = vpack.c.b16 %v246, %v241
    %v267 = vpack.c.b16 %v247, %v242
    %v268 = vpack.c.b16 %v248, %v243
    %v269 = vpack.c.b16 %v249, %v244
    %v270 = vpack.c.b16 %v250, %v245
    %v271 = vpack.c.b16 %v256, %v251
    %v272 = vpack.c.b16 %v257, %v252
    %v273 = vpack.c.b16 %v258, %v253
    %v274 = vpack.c.b16 %v259, %v254
    %v275 = vpack.c.b16 %v260, %v255
    %vm291 = vcmask 392192
    %v293 = vsel %vm291, %v182, 0
    %295 = vmatpush.bf16.msra.mxu0 0
    %296 = vmatpush.bf16.msra.mxu0 0
    %297 = vmatpush.bf16.msra.mxu0 0
    %298 = vmatpush.bf16.msra.mxu0 0
    %299 = vmatpush.bf16.msra.mxu0 0
    %300 = vmatpush.bf16.msra.mxu0 %v271
    %301 = vmatpush.bf16.msra.mxu0 %v266
    %302 = vmatpush.bf16.msra.mxu0 %v261
    %303 = vmatmul.bf16.gmra.mxu0 %v293
    %v304 = vpop.f32.mrf.mxu0
    %v305 = vadd.f32 %v203, %v304
    %v306 = vpop.f32.mrf.mxu0
    %307 = vdwg.mxu0
    %308 = vmatpush.bf16.msra.mxu0 0
    %309 = vmatpush.bf16.msra.mxu0 0
    %310 = vmatpush.bf16.msra.mxu0 0
    %311 = vmatpush.bf16.msra.mxu0 0
    %312 = vmatpush.bf16.msra.mxu0 0
    %313 = vmatpush.bf16.msra.mxu0 %v272
    %314 = vmatpush.bf16.msra.mxu0 %v267
    %315 = vmatpush.bf16.msra.mxu0 %v262
    %316 = vmatmul.bf16.gmra.mxu0 %v293
    %v317 = vpop.f32.mrf.mxu0
    %v318 = vadd.f32 %v204, %v317
    %v319 = vpop.f32.mrf.mxu0
    %320 = vdwg.mxu0
    %321 = vmatpush.bf16.msra.mxu0 0
    %322 = vmatpush.bf16.msra.mxu0 0
    %323 = vmatpush.bf16.msra.mxu0 0
    %324 = vmatpush.bf16.msra.mxu0 0
    %325 = vmatpush.bf16.msra.mxu0 0
    %326 = vmatpush.bf16.msra.mxu0 %v273
    %327 = vmatpush.bf16.msra.mxu0 %v268
    %328 = vmatpush.bf16.msra.mxu0 %v263
    %329 = vmatmul.bf16.gmra.mxu0 %v293
    %v330 = vpop.f32.mrf.mxu0
    %v331 = vadd.f32 %v205, %v330
    %v332 = vpop.f32.mrf.mxu0
    %333 = vdwg.mxu0
    %334 = vmatpush.bf16.msra.mxu0 0
    %335 = vmatpush.bf16.msra.mxu0 0
    %336 = vmatpush.bf16.msra.mxu0 0
    %337 = vmatpush.bf16.msra.mxu0 0
    %338 = vmatpush.bf16.msra.mxu0 0
    %339 = vmatpush.bf16.msra.mxu0 %v274
    %340 = vmatpush.bf16.msra.mxu0 %v269
    %341 = vmatpush.bf16.msra.mxu0 %v264
    %342 = vmatmul.bf16.gmra.mxu0 %v293
    %v343 = vpop.f32.mrf.mxu0
    %v344 = vadd.f32 %v206, %v343
    %v345 = vpop.f32.mrf.mxu0
    %346 = vdwg.mxu0
    %347 = vmatpush.bf16.msra.mxu0 0
    %348 = vmatpush.bf16.msra.mxu0 0
    %349 = vmatpush.bf16.msra.mxu0 0
    %350 = vmatpush.bf16.msra.mxu0 0
    %351 = vmatpush.bf16.msra.mxu0 0
    %352 = vmatpush.bf16.msra.mxu0 %v275
    %353 = vmatpush.bf16.msra.mxu0 %v270
    %354 = vmatpush.bf16.msra.mxu0 %v265
    %355 = vmatmul.bf16.gmra.mxu0 %v293
    %v356 = vpop.f32.mrf.mxu0
    %v357 = vadd.f32 %v207, %v356
    %v358 = vpop.f32.mrf.mxu0
    %359 = vdwg.mxu0
    %v360 = vadd.f32 %v305, %v318
    %v361 = vadd.f32 %v360, %v331
    %v362 = vadd.f32 %v361, %v344
    %v363 = vadd.f32 %v362, %v357
    %364 = vadd.xlane.f32.xlu0 %v363
    %v365 = vpop.xlane.xlu0 %364
    %v366 = vmul.f32 %v365, 0.0016666667
    %v367 = vmul.f32 %v305, %v305
    %v368 = vmul.f32 %v318, %v318
    %v369 = vmul.f32 %v331, %v331
    %v370 = vmul.f32 %v344, %v344
    %v371 = vmul.f32 %v357, %v357
    %v372 = vadd.f32 %v367, %v368
    %v373 = vadd.f32 %v372, %v369
    %v374 = vadd.f32 %v373, %v370
    %v375 = vadd.f32 %v374, %v371
    %376 = vadd.xlane.f32.xlu0 %v375
    %v377 = vpop.xlane.xlu0 %376
    %v378 = vmul.f32 %v377, 0.0016666667
    %v379 = vmul.f32 %v366, %v366
    %v380 = vsub.f32 %v378, %v379
    %v381 = vmax.f32 %v380, 0.0
    %v382 = vsub.f32 %v305, %v366
    %v383 = vsub.f32 %v318, %v366
    %v384 = vsub.f32 %v331, %v366
    %v385 = vsub.f32 %v344, %v366
    %v386 = vsub.f32 %v357, %v366
    %v387 = vadd.f32 %v381, 1e-05
    %v388 = vrsqrt.pop %v387
    %v389 = vmul.f32 %v388, %v387
    %v390 = vmul.f32 %v389, %v388
    %v391 = vmul.f32 0.5, %v390
    %v392 = vsub.f32 1.5, %v391
    %v393 = vmul.f32 %v388, %v392
    %vm394 = vweird.f32 %v387
    %vm395 = vweird.f32 %v388
    %vm396 = vmor %vm394, %vm395
    %v397 = vsel %vm396, %v388, %v393
    %v398 = vmul.f32 %v382, %v397
    %v399 = vmul.f32 %v383, %v397
    %v400 = vmul.f32 %v384, %v397
    %v401 = vmul.f32 %v385, %v397
    %v402 = vmul.f32 %v386, %v397
    %v403 = vld [vmem:[%s3] sm:$0x1f]
    %v405 = vperm.slane %v403, 0
    %v406 = vperm.slane %v403, 1
    %v407 = vperm.slane %v403, 2
    %v408 = vperm.slane %v403, 3
    %v409 = vperm.slane %v403, 4
    %v415 = vmul.f32 %v398, %v405
    %v416 = vmul.f32 %v399, %v406
    %v417 = vmul.f32 %v400, %v407
    %v418 = vmul.f32 %v401, %v408
    %v419 = vmul.f32 %v402, %v409
    %v420 = vld [vmem:[%s4] sm:$0x1f]
    %v422 = vperm.slane %v420, 0
    %v423 = vperm.slane %v420, 1
    %v424 = vperm.slane %v420, 2
    %v425 = vperm.slane %v420, 3
    %v426 = vperm.slane %v420, 4
    %v432 = vadd.f32 %v415, %v422
    %v433 = vadd.f32 %v416, %v423
    %v434 = vadd.f32 %v417, %v424
    %v435 = vadd.f32 %v418, %v425
    %v436 = vadd.f32 %v419, %v426
    %v437 = vmax.f32 %v432, 0.0
    %v438 = vmax.f32 %v433, 0.0
    %v439 = vmax.f32 %v434, 0.0
    %v440 = vmax.f32 %v435, 0.0
    %v441 = vmax.f32 %v436, 0.0
    %v442 = vpack.c.bf16 %v437, %v437
    %v443 = vpack.c.bf16 %v438, %v438
    %v444 = vpack.c.bf16 %v439, %v439
    %v445 = vpack.c.bf16 %v440, %v440
    %v446 = vpack.c.bf16 %v441, %v441
    %v447 = vld [vmem:[#allocation4] sm:$0xff]
    %v448 = vld [vmem:[#allocation4 + $0x8] sm:$0xff]
    %v449 = vld [vmem:[#allocation4 + $0x10] sm:$0xff]
    %v450 = vld [vmem:[#allocation4 + $0x18] sm:$0xff]
    %v451 = vld [vmem:[#allocation4 + $0x20] sm:$0xff]
    %v452 = vld [vmem:[#allocation4 + $0x28] sm:$0xff]
    %v453 = vld [vmem:[#allocation4 + $0x30] sm:$0xff]
    %v454 = vld [vmem:[#allocation4 + $0x38] sm:$0xff]
    %v455 = vld [vmem:[#allocation4 + $0x40] sm:$0xff]
    %v456 = vld [vmem:[#allocation4 + $0x48] sm:$0xff]
    %v457 = vld [vmem:[#allocation4 + $0x50] sm:$0xff]
    %v458 = vld [vmem:[#allocation4 + $0x58] sm:$0xff]
    %v459 = vld [vmem:[#allocation4 + $0x60] sm:$0xff]
    %v460 = vld [vmem:[#allocation4 + $0x68] sm:$0xff]
    %v461 = vld [vmem:[#allocation4 + $0x70] sm:$0xff]
    %v462 = vld [vmem:[#allocation4 + $0x78] sm:$0xff]
    %v463 = vld [vmem:[#allocation4 + $0x80] sm:$0xff]
    %v464 = vld [vmem:[#allocation4 + $0x88] sm:$0xff]
    %v465 = vld [vmem:[#allocation4 + $0x90] sm:$0xff]
    %v466 = vld [vmem:[#allocation4 + $0x98] sm:$0xff]
    %v467 = vld [vmem:[#allocation4 + $0xa0] sm:$0xff]
    %v468 = vld [vmem:[#allocation4 + $0xa8] sm:$0xff]
    %v469 = vld [vmem:[#allocation4 + $0xb0] sm:$0xff]
    %v470 = vld [vmem:[#allocation4 + $0xb8] sm:$0xff]
    %v471 = vld [vmem:[#allocation4 + $0xc0] sm:$0xff]
    %v472 = vld [vmem:[#allocation4 + $0xc8] sm:$0xff]
    %v473 = vld [vmem:[#allocation4 + $0xd0] sm:$0xff]
    %v474 = vld [vmem:[#allocation4 + $0xd8] sm:$0xff]
    %v475 = vld [vmem:[#allocation4 + $0xe0] sm:$0xff]
    %v476 = vld [vmem:[#allocation4 + $0xe8] sm:$0xff]
    %v477 = vld [vmem:[#allocation4 + $0xf0] sm:$0xff]
    %v478 = vld [vmem:[#allocation4 + $0xf8] sm:$0xff]
    %v479 = vld [vmem:[#allocation4 + $0x100] sm:$0xff]
    %v480 = vld [vmem:[#allocation4 + $0x108] sm:$0xff]
    %v481 = vld [vmem:[#allocation4 + $0x110] sm:$0xff]
    %v482 = vld [vmem:[#allocation4 + $0x118] sm:$0xff]
    %v483 = vld [vmem:[#allocation4 + $0x120] sm:$0xff]
    %v484 = vld [vmem:[#allocation4 + $0x128] sm:$0xff]
    %v485 = vld [vmem:[#allocation4 + $0x130] sm:$0xff]
    %v486 = vld [vmem:[#allocation4 + $0x138] sm:$0xff]
    %v487 = vld [vmem:[#allocation4 + $0x140] sm:$0xff]
    %v488 = vld [vmem:[#allocation4 + $0x148] sm:$0xff]
    %v489 = vld [vmem:[#allocation4 + $0x150] sm:$0xff]
    %v490 = vld [vmem:[#allocation4 + $0x158] sm:$0xff]
    %v491 = vld [vmem:[#allocation4 + $0x160] sm:$0xff]
    %v492 = vld [vmem:[#allocation4 + $0x168] sm:$0xff]
    %v493 = vld [vmem:[#allocation4 + $0x170] sm:$0xff]
    %v494 = vld [vmem:[#allocation4 + $0x178] sm:$0xff]
    %v495 = vld [vmem:[#allocation4 + $0x180] sm:$0xff]
    %v496 = vld [vmem:[#allocation4 + $0x188] sm:$0xff]
    %v497 = vld [vmem:[#allocation4 + $0x190] sm:$0xff]
    %v498 = vld [vmem:[#allocation4 + $0x198] sm:$0xff]
    %v499 = vld [vmem:[#allocation4 + $0x1a0] sm:$0xff]
    %v500 = vld [vmem:[#allocation4 + $0x1a8] sm:$0xff]
    %v501 = vld [vmem:[#allocation4 + $0x1b0] sm:$0xff]
    %v502 = vld [vmem:[#allocation4 + $0x1b8] sm:$0xff]
    %v503 = vld [vmem:[#allocation4 + $0x1c0] sm:$0xff]
    %v504 = vld [vmem:[#allocation4 + $0x1c8] sm:$0xff]
    %v505 = vld [vmem:[#allocation4 + $0x1d0] sm:$0xff]
    %v506 = vld [vmem:[#allocation4 + $0x1d8] sm:$0xff]
    %v507 = vld [vmem:[#allocation4 + $0x1e0] sm:$0xff]
    %v508 = vld [vmem:[#allocation4 + $0x1e8] sm:$0xff]
    %v509 = vld [vmem:[#allocation4 + $0x1f0] sm:$0xff]
    %v510 = vld [vmem:[#allocation4 + $0x1f8] sm:$0xff]
    %v511 = vld [vmem:[#allocation4 + $0x200] sm:$0xff]
    %v512 = vld [vmem:[#allocation4 + $0x208] sm:$0xff]
    %v513 = vld [vmem:[#allocation4 + $0x210] sm:$0xff]
    %v514 = vld [vmem:[#allocation4 + $0x218] sm:$0xff]
    %v515 = vld [vmem:[#allocation4 + $0x220] sm:$0xff]
    %v516 = vld [vmem:[#allocation4 + $0x228] sm:$0xff]
    %v517 = vld [vmem:[#allocation4 + $0x230] sm:$0xff]
    %v518 = vld [vmem:[#allocation4 + $0x238] sm:$0xff]
    %v519 = vld [vmem:[#allocation4 + $0x240] sm:$0xff]
    %v520 = vld [vmem:[#allocation4 + $0x248] sm:$0xff]
    %v521 = vld [vmem:[#allocation4 + $0x250] sm:$0xff]
    %v522 = vld [vmem:[#allocation4 + $0x258] sm:$0xff]
    %v523 = vld [vmem:[#allocation4 + $0x260] sm:$0xff]
    %v524 = vld [vmem:[#allocation4 + $0x268] sm:$0xff]
    %v525 = vld [vmem:[#allocation4 + $0x270] sm:$0xff]
    %v526 = vld [vmem:[#allocation4 + $0x278] sm:$0xff]
    %v527 = vld [vmem:[#allocation6] sm:$0x3]
    %v529 = vperm.slane %v527, 0
    %v530 = vperm.slane %v527, 1
    %v613 = vunpack.c.l.b16 %v447
    %v614 = vunpack.c.h.b16 %v447
    %v615 = vunpack.c.l.b16 %v448
    %v616 = vunpack.c.h.b16 %v448
    %v617 = vunpack.c.l.b16 %v449
    %v618 = vunpack.c.h.b16 %v449
    %v619 = vunpack.c.l.b16 %v450
    %v620 = vunpack.c.h.b16 %v450
    %v621 = vunpack.c.l.b16 %v451
    %v622 = vunpack.c.h.b16 %v451
    %v623 = vunpack.c.l.b16 %v452
    %v624 = vunpack.c.h.b16 %v452
    %v625 = vunpack.c.l.b16 %v453
    %v626 = vunpack.c.h.b16 %v453
    %v627 = vunpack.c.l.b16 %v454
    %v628 = vunpack.c.h.b16 %v454
    %v629 = vunpack.c.l.b16 %v455
    %v630 = vunpack.c.h.b16 %v455
    %v631 = vunpack.c.l.b16 %v456
    %v632 = vunpack.c.h.b16 %v456
    %v633 = vunpack.c.l.b16 %v457
    %v634 = vunpack.c.h.b16 %v457
    %v635 = vunpack.c.l.b16 %v458
    %v636 = vunpack.c.h.b16 %v458
    %v637 = vunpack.c.l.b16 %v459
    %v638 = vunpack.c.h.b16 %v459
    %v639 = vunpack.c.l.b16 %v460
    %v640 = vunpack.c.h.b16 %v460
    %v641 = vunpack.c.l.b16 %v461
    %v642 = vunpack.c.h.b16 %v461
    %v643 = vunpack.c.l.b16 %v462
    %v644 = vunpack.c.h.b16 %v462
    %v645 = vunpack.c.l.b16 %v463
    %v646 = vunpack.c.h.b16 %v463
    %v647 = vunpack.c.l.b16 %v464
    %v648 = vunpack.c.h.b16 %v464
    %v649 = vunpack.c.l.b16 %v465
    %v650 = vunpack.c.h.b16 %v465
    %v651 = vunpack.c.l.b16 %v466
    %v652 = vunpack.c.h.b16 %v466
    %v653 = vunpack.c.l.b16 %v467
    %v654 = vunpack.c.h.b16 %v467
    %v655 = vunpack.c.l.b16 %v468
    %v656 = vunpack.c.h.b16 %v468
    %v657 = vunpack.c.l.b16 %v469
    %v658 = vunpack.c.h.b16 %v469
    %v659 = vunpack.c.l.b16 %v470
    %v660 = vunpack.c.h.b16 %v470
    %v661 = vunpack.c.l.b16 %v471
    %v662 = vunpack.c.h.b16 %v471
    %v663 = vunpack.c.l.b16 %v472
    %v664 = vunpack.c.h.b16 %v472
    %v665 = vunpack.c.l.b16 %v473
    %v666 = vunpack.c.h.b16 %v473
    %v667 = vunpack.c.l.b16 %v474
    %v668 = vunpack.c.h.b16 %v474
    %v669 = vunpack.c.l.b16 %v475
    %v670 = vunpack.c.h.b16 %v475
    %v671 = vunpack.c.l.b16 %v476
    %v672 = vunpack.c.h.b16 %v476
    %v673 = vunpack.c.l.b16 %v477
    %v674 = vunpack.c.h.b16 %v477
    %v675 = vunpack.c.l.b16 %v478
    %v676 = vunpack.c.h.b16 %v478
    %v677 = vunpack.c.l.b16 %v479
    %v678 = vunpack.c.h.b16 %v479
    %v679 = vunpack.c.l.b16 %v480
    %v680 = vunpack.c.h.b16 %v480
    %v681 = vunpack.c.l.b16 %v481
    %v682 = vunpack.c.h.b16 %v481
    %v683 = vunpack.c.l.b16 %v482
    %v684 = vunpack.c.h.b16 %v482
    %v685 = vunpack.c.l.b16 %v483
    %v686 = vunpack.c.h.b16 %v483
    %v687 = vunpack.c.l.b16 %v484
    %v688 = vunpack.c.h.b16 %v484
    %v689 = vunpack.c.l.b16 %v485
    %v690 = vunpack.c.h.b16 %v485
    %v691 = vunpack.c.l.b16 %v486
    %v692 = vunpack.c.h.b16 %v486
    %v693 = vunpack.c.l.b16 %v487
    %v694 = vunpack.c.h.b16 %v487
    %v695 = vunpack.c.l.b16 %v488
    %v696 = vunpack.c.h.b16 %v488
    %v697 = vunpack.c.l.b16 %v489
    %v698 = vunpack.c.h.b16 %v489
    %v699 = vunpack.c.l.b16 %v490
    %v700 = vunpack.c.h.b16 %v490
    %v701 = vunpack.c.l.b16 %v491
    %v702 = vunpack.c.h.b16 %v491
    %v703 = vunpack.c.l.b16 %v492
    %v704 = vunpack.c.h.b16 %v492
    %v705 = vunpack.c.l.b16 %v493
    %v706 = vunpack.c.h.b16 %v493
    %v707 = vunpack.c.l.b16 %v494
    %v708 = vunpack.c.h.b16 %v494
    %v709 = vunpack.c.l.b16 %v495
    %v710 = vunpack.c.h.b16 %v495
    %v711 = vunpack.c.l.b16 %v496
    %v712 = vunpack.c.h.b16 %v496
    %v713 = vunpack.c.l.b16 %v497
    %v714 = vunpack.c.h.b16 %v497
    %v715 = vunpack.c.l.b16 %v498
    %v716 = vunpack.c.h.b16 %v498
    %v717 = vunpack.c.l.b16 %v499
    %v718 = vunpack.c.h.b16 %v499
    %v719 = vunpack.c.l.b16 %v500
    %v720 = vunpack.c.h.b16 %v500
    %v721 = vunpack.c.l.b16 %v501
    %v722 = vunpack.c.h.b16 %v501
    %v723 = vunpack.c.l.b16 %v502
    %v724 = vunpack.c.h.b16 %v502
    %v725 = vunpack.c.l.b16 %v503
    %v726 = vunpack.c.h.b16 %v503
    %v727 = vunpack.c.l.b16 %v504
    %v728 = vunpack.c.h.b16 %v504
    %v729 = vunpack.c.l.b16 %v505
    %v730 = vunpack.c.h.b16 %v505
    %v731 = vunpack.c.l.b16 %v506
    %v732 = vunpack.c.h.b16 %v506
    %v733 = vunpack.c.l.b16 %v507
    %v734 = vunpack.c.h.b16 %v507
    %v735 = vunpack.c.l.b16 %v508
    %v736 = vunpack.c.h.b16 %v508
    %v737 = vunpack.c.l.b16 %v509
    %v738 = vunpack.c.h.b16 %v509
    %v739 = vunpack.c.l.b16 %v510
    %v740 = vunpack.c.h.b16 %v510
    %v741 = vunpack.c.l.b16 %v511
    %v742 = vunpack.c.h.b16 %v511
    %v743 = vunpack.c.l.b16 %v512
    %v744 = vunpack.c.h.b16 %v512
    %v745 = vunpack.c.l.b16 %v513
    %v746 = vunpack.c.h.b16 %v513
    %v747 = vunpack.c.l.b16 %v514
    %v748 = vunpack.c.h.b16 %v514
    %v749 = vunpack.c.l.b16 %v515
    %v750 = vunpack.c.h.b16 %v515
    %v751 = vunpack.c.l.b16 %v516
    %v752 = vunpack.c.h.b16 %v516
    %v753 = vunpack.c.l.b16 %v517
    %v754 = vunpack.c.h.b16 %v517
    %v755 = vunpack.c.l.b16 %v518
    %v756 = vunpack.c.h.b16 %v518
    %v757 = vunpack.c.l.b16 %v519
    %v758 = vunpack.c.h.b16 %v519
    %v759 = vunpack.c.l.b16 %v520
    %v760 = vunpack.c.h.b16 %v520
    %v761 = vunpack.c.l.b16 %v521
    %v762 = vunpack.c.h.b16 %v521
    %v763 = vunpack.c.l.b16 %v522
    %v764 = vunpack.c.h.b16 %v522
    %v765 = vunpack.c.l.b16 %v523
    %v766 = vunpack.c.h.b16 %v523
    %v767 = vunpack.c.l.b16 %v524
    %v768 = vunpack.c.h.b16 %v524
    %v769 = vunpack.c.l.b16 %v525
    %v770 = vunpack.c.h.b16 %v525
    %v771 = vunpack.c.l.b16 %v526
    %v772 = vunpack.c.h.b16 %v526
    %v773 = vpack.c.b16 %v615, %v613
    %v774 = vpack.c.b16 %v616, %v614
    %v775 = vpack.c.b16 %v619, %v617
    %v776 = vpack.c.b16 %v620, %v618
    %v777 = vpack.c.b16 %v623, %v621
    %v778 = vpack.c.b16 %v624, %v622
    %v779 = vpack.c.b16 %v627, %v625
    %v780 = vpack.c.b16 %v628, %v626
    %v781 = vpack.c.b16 %v631, %v629
    %v782 = vpack.c.b16 %v632, %v630
    %v783 = vpack.c.b16 %v635, %v633
    %v784 = vpack.c.b16 %v636, %v634
    %v785 = vpack.c.b16 %v639, %v637
    %v786 = vpack.c.b16 %v640, %v638
    %v787 = vpack.c.b16 %v643, %v641
    %v788 = vpack.c.b16 %v644, %v642
    %v789 = vpack.c.b16 %v647, %v645
    %v790 = vpack.c.b16 %v648, %v646
    %v791 = vpack.c.b16 %v651, %v649
    %v792 = vpack.c.b16 %v652, %v650
    %v793 = vpack.c.b16 %v655, %v653
    %v794 = vpack.c.b16 %v656, %v654
    %v795 = vpack.c.b16 %v659, %v657
    %v796 = vpack.c.b16 %v660, %v658
    %v797 = vpack.c.b16 %v663, %v661
    %v798 = vpack.c.b16 %v664, %v662
    %v799 = vpack.c.b16 %v667, %v665
    %v800 = vpack.c.b16 %v668, %v666
    %v801 = vpack.c.b16 %v671, %v669
    %v802 = vpack.c.b16 %v672, %v670
    %v803 = vpack.c.b16 %v675, %v673
    %v804 = vpack.c.b16 %v676, %v674
    %v805 = vpack.c.b16 %v679, %v677
    %v806 = vpack.c.b16 %v680, %v678
    %v807 = vpack.c.b16 %v683, %v681
    %v808 = vpack.c.b16 %v684, %v682
    %v809 = vpack.c.b16 %v687, %v685
    %v810 = vpack.c.b16 %v688, %v686
    %v811 = vpack.c.b16 %v691, %v689
    %v812 = vpack.c.b16 %v692, %v690
    %v813 = vpack.c.b16 %v695, %v693
    %v814 = vpack.c.b16 %v696, %v694
    %v815 = vpack.c.b16 %v699, %v697
    %v816 = vpack.c.b16 %v700, %v698
    %v817 = vpack.c.b16 %v703, %v701
    %v818 = vpack.c.b16 %v704, %v702
    %v819 = vpack.c.b16 %v707, %v705
    %v820 = vpack.c.b16 %v708, %v706
    %v821 = vpack.c.b16 %v711, %v709
    %v822 = vpack.c.b16 %v712, %v710
    %v823 = vpack.c.b16 %v715, %v713
    %v824 = vpack.c.b16 %v716, %v714
    %v825 = vpack.c.b16 %v719, %v717
    %v826 = vpack.c.b16 %v720, %v718
    %v827 = vpack.c.b16 %v723, %v721
    %v828 = vpack.c.b16 %v724, %v722
    %v829 = vpack.c.b16 %v727, %v725
    %v830 = vpack.c.b16 %v728, %v726
    %v831 = vpack.c.b16 %v731, %v729
    %v832 = vpack.c.b16 %v732, %v730
    %v833 = vpack.c.b16 %v735, %v733
    %v834 = vpack.c.b16 %v736, %v734
    %v835 = vpack.c.b16 %v739, %v737
    %v836 = vpack.c.b16 %v740, %v738
    %v837 = vpack.c.b16 %v743, %v741
    %v838 = vpack.c.b16 %v744, %v742
    %v839 = vpack.c.b16 %v747, %v745
    %v840 = vpack.c.b16 %v748, %v746
    %v841 = vpack.c.b16 %v751, %v749
    %v842 = vpack.c.b16 %v752, %v750
    %v843 = vpack.c.b16 %v755, %v753
    %v844 = vpack.c.b16 %v756, %v754
    %v845 = vpack.c.b16 %v759, %v757
    %v846 = vpack.c.b16 %v760, %v758
    %v847 = vpack.c.b16 %v763, %v761
    %v848 = vpack.c.b16 %v764, %v762
    %v849 = vpack.c.b16 %v767, %v765
    %v850 = vpack.c.b16 %v768, %v766
    %v851 = vpack.c.b16 %v771, %v769
    %v852 = vpack.c.b16 %v772, %v770
    %933 = vmatpush.bf16.msra.mxu0 %v787
    %934 = vmatpush.bf16.msra.mxu0 %v785
    %935 = vmatpush.bf16.msra.mxu0 %v783
    %936 = vmatpush.bf16.msra.mxu0 %v781
    %937 = vmatpush.bf16.msra.mxu0 %v779
    %938 = vmatpush.bf16.msra.mxu0 %v777
    %939 = vmatpush.bf16.msra.mxu0 %v775
    %940 = vmatpush.bf16.msra.mxu0 %v773
    %941 = vmatmul.bf16.gmra.mxu0 %v442
    %v942 = vpop.f32.mrf.mxu0
    %v943 = vadd.f32 %v529, %v942
    %v944 = vpop.f32.mrf.mxu0
    %945 = vdwg.mxu0
    %946 = vmatpush.bf16.msra.mxu0 %v803
    %947 = vmatpush.bf16.msra.mxu0 %v801
    %948 = vmatpush.bf16.msra.mxu0 %v799
    %949 = vmatpush.bf16.msra.mxu0 %v797
    %950 = vmatpush.bf16.msra.mxu0 %v795
    %951 = vmatpush.bf16.msra.mxu0 %v793
    %952 = vmatpush.bf16.msra.mxu0 %v791
    %953 = vmatpush.bf16.msra.mxu0 %v789
    %954 = vmatmul.bf16.gmra.mxu0 %v443
    %v955 = vpop.f32.mrf.mxu0
    %v956 = vadd.f32 %v943, %v955
    %v957 = vpop.f32.mrf.mxu0
    %958 = vdwg.mxu0
    %959 = vmatpush.bf16.msra.mxu0 %v819
    %960 = vmatpush.bf16.msra.mxu0 %v817
    %961 = vmatpush.bf16.msra.mxu0 %v815
    %962 = vmatpush.bf16.msra.mxu0 %v813
    %963 = vmatpush.bf16.msra.mxu0 %v811
    %964 = vmatpush.bf16.msra.mxu0 %v809
    %965 = vmatpush.bf16.msra.mxu0 %v807
    %966 = vmatpush.bf16.msra.mxu0 %v805
    %967 = vmatmul.bf16.gmra.mxu0 %v444
    %v968 = vpop.f32.mrf.mxu0
    %v969 = vadd.f32 %v956, %v968
    %v970 = vpop.f32.mrf.mxu0
    %971 = vdwg.mxu0
    %972 = vmatpush.bf16.msra.mxu0 %v835
    %973 = vmatpush.bf16.msra.mxu0 %v833
    %974 = vmatpush.bf16.msra.mxu0 %v831
    %975 = vmatpush.bf16.msra.mxu0 %v829
    %976 = vmatpush.bf16.msra.mxu0 %v827
    %977 = vmatpush.bf16.msra.mxu0 %v825
    %978 = vmatpush.bf16.msra.mxu0 %v823
    %979 = vmatpush.bf16.msra.mxu0 %v821
    %980 = vmatmul.bf16.gmra.mxu0 %v445
    %v981 = vpop.f32.mrf.mxu0
    %v982 = vadd.f32 %v969, %v981
    %v983 = vpop.f32.mrf.mxu0
    %984 = vdwg.mxu0
    %985 = vmatpush.bf16.msra.mxu0 %v851
    %986 = vmatpush.bf16.msra.mxu0 %v849
    %987 = vmatpush.bf16.msra.mxu0 %v847
    %988 = vmatpush.bf16.msra.mxu0 %v845
    %989 = vmatpush.bf16.msra.mxu0 %v843
    %990 = vmatpush.bf16.msra.mxu0 %v841
    %991 = vmatpush.bf16.msra.mxu0 %v839
    %992 = vmatpush.bf16.msra.mxu0 %v837
    %993 = vmatmul.bf16.gmra.mxu0 %v446
    %v994 = vpop.f32.mrf.mxu0
    %v995 = vadd.f32 %v982, %v994
    %v996 = vpop.f32.mrf.mxu0
    %997 = vdwg.mxu0
    %998 = vmatpush.bf16.msra.mxu0 %v788
    %999 = vmatpush.bf16.msra.mxu0 %v786
    %1000 = vmatpush.bf16.msra.mxu0 %v784
    %1001 = vmatpush.bf16.msra.mxu0 %v782
    %1002 = vmatpush.bf16.msra.mxu0 %v780
    %1003 = vmatpush.bf16.msra.mxu0 %v778
    %1004 = vmatpush.bf16.msra.mxu0 %v776
    %1005 = vmatpush.bf16.msra.mxu0 %v774
    %1006 = vmatmul.bf16.gmra.mxu0 %v442
    %v1007 = vpop.f32.mrf.mxu0
    %v1008 = vadd.f32 %v530, %v1007
    %v1009 = vpop.f32.mrf.mxu0
    %1010 = vdwg.mxu0
    %1011 = vmatpush.bf16.msra.mxu0 %v804
    %1012 = vmatpush.bf16.msra.mxu0 %v802
    %1013 = vmatpush.bf16.msra.mxu0 %v800
    %1014 = vmatpush.bf16.msra.mxu0 %v798
    %1015 = vmatpush.bf16.msra.mxu0 %v796
    %1016 = vmatpush.bf16.msra.mxu0 %v794
    %1017 = vmatpush.bf16.msra.mxu0 %v792
    %1018 = vmatpush.bf16.msra.mxu0 %v790
    %1019 = vmatmul.bf16.gmra.mxu0 %v443
    %v1020 = vpop.f32.mrf.mxu0
    %v1021 = vadd.f32 %v1008, %v1020
    %v1022 = vpop.f32.mrf.mxu0
    %1023 = vdwg.mxu0
    %1024 = vmatpush.bf16.msra.mxu0 %v820
    %1025 = vmatpush.bf16.msra.mxu0 %v818
    %1026 = vmatpush.bf16.msra.mxu0 %v816
    %1027 = vmatpush.bf16.msra.mxu0 %v814
    %1028 = vmatpush.bf16.msra.mxu0 %v812
    %1029 = vmatpush.bf16.msra.mxu0 %v810
    %1030 = vmatpush.bf16.msra.mxu0 %v808
    %1031 = vmatpush.bf16.msra.mxu0 %v806
    %1032 = vmatmul.bf16.gmra.mxu0 %v444
    %v1033 = vpop.f32.mrf.mxu0
    %v1034 = vadd.f32 %v1021, %v1033
    %v1035 = vpop.f32.mrf.mxu0
    %1036 = vdwg.mxu0
    %1037 = vmatpush.bf16.msra.mxu0 %v836
    %1038 = vmatpush.bf16.msra.mxu0 %v834
    %1039 = vmatpush.bf16.msra.mxu0 %v832
    %1040 = vmatpush.bf16.msra.mxu0 %v830
    %1041 = vmatpush.bf16.msra.mxu0 %v828
    %1042 = vmatpush.bf16.msra.mxu0 %v826
    %1043 = vmatpush.bf16.msra.mxu0 %v824
    %1044 = vmatpush.bf16.msra.mxu0 %v822
    %1045 = vmatmul.bf16.gmra.mxu0 %v445
    %v1046 = vpop.f32.mrf.mxu0
    %v1047 = vadd.f32 %v1034, %v1046
    %v1048 = vpop.f32.mrf.mxu0
    %1049 = vdwg.mxu0
    %1050 = vmatpush.bf16.msra.mxu0 %v852
    %1051 = vmatpush.bf16.msra.mxu0 %v850
    %1052 = vmatpush.bf16.msra.mxu0 %v848
    %1053 = vmatpush.bf16.msra.mxu0 %v846
    %1054 = vmatpush.bf16.msra.mxu0 %v844
    %1055 = vmatpush.bf16.msra.mxu0 %v842
    %1056 = vmatpush.bf16.msra.mxu0 %v840
    %1057 = vmatpush.bf16.msra.mxu0 %v838
    %1058 = vmatmul.bf16.gmra.mxu0 %v446
    %v1059 = vpop.f32.mrf.mxu0
    %v1060 = vadd.f32 %v1047, %v1059
    %v1061 = vpop.f32.mrf.mxu0
    %1062 = vdwg.mxu0
    %v1063 = vadd.f32 %v995, %v1060
    %1064 = vadd.xlane.f32.xlu0 %v1063
    %v1065 = vpop.xlane.xlu0 %1064
    %v1066 = vmul.f32 %v1065, 0.005
    %v1067 = vmul.f32 %v995, %v995
    %v1068 = vmul.f32 %v1060, %v1060
    %v1069 = vadd.f32 %v1067, %v1068
    %1070 = vadd.xlane.f32.xlu0 %v1069
    %v1071 = vpop.xlane.xlu0 %1070
    %v1072 = vmul.f32 %v1071, 0.005
    %v1073 = vmul.f32 %v1066, %v1066
    %v1074 = vsub.f32 %v1072, %v1073
    %v1075 = vmax.f32 %v1074, 0.0
    %v1076 = vsub.f32 %v995, %v1066
    %v1077 = vsub.f32 %v1060, %v1066
    %v1078 = vadd.f32 %v1075, 1e-05
    %v1079 = vrsqrt.pop %v1078
    %v1080 = vmul.f32 %v1079, %v1078
    %v1081 = vmul.f32 %v1080, %v1079
    %v1082 = vmul.f32 0.5, %v1081
    %v1083 = vsub.f32 1.5, %v1082
    %v1084 = vmul.f32 %v1079, %v1083
    %vm1085 = vweird.f32 %v1078
    %vm1086 = vweird.f32 %v1079
    %vm1087 = vmor %vm1085, %vm1086
    %v1088 = vsel %vm1087, %v1079, %v1084
    %v1089 = vmul.f32 %v1076, %v1088
    %v1090 = vmul.f32 %v1077, %v1088
    %v1091 = vld [vmem:[%s7] sm:$0x3]
    %v1093 = vperm.slane %v1091, 0
    %v1094 = vperm.slane %v1091, 1
    %v1097 = vmul.f32 %v1089, %v1093
    %v1098 = vmul.f32 %v1090, %v1094
    %v1099 = vld [vmem:[#allocation7] sm:$0x3]
    %v1101 = vperm.slane %v1099, 0
    %v1102 = vperm.slane %v1099, 1
    %v1105 = vadd.f32 %v1097, %v1101
    %v1106 = vadd.f32 %v1098, %v1102
    %v1107 = vmax.f32 %v1105, 0.0
    %v1108 = vmax.f32 %v1106, 0.0
    %v1109 = vpack.c.bf16 %v1107, %v1107
    %v1110 = vpack.c.bf16 %v1108, %v1108
    %v1111 = vld [vmem:[#allocation9] sm:$0xf]
    %v1112 = vld [vmem:[#allocation9 + $0x4] sm:$0xf]
    %v1113 = vld [vmem:[#allocation9 + $0x8] sm:$0xf]
    %v1114 = vld [vmem:[#allocation9 + $0xc] sm:$0xf]
    %v1115 = vld [vmem:[#allocation9 + $0x10] sm:$0xf]
    %v1116 = vld [vmem:[#allocation9 + $0x14] sm:$0xf]
    %v1117 = vld [vmem:[#allocation9 + $0x18] sm:$0xf]
    %v1118 = vld [vmem:[#allocation9 + $0x1c] sm:$0xf]
    %v1119 = vld [vmem:[#allocation9 + $0x20] sm:$0xf]
    %v1120 = vld [vmem:[#allocation9 + $0x24] sm:$0xf]
    %v1121 = vld [vmem:[#allocation9 + $0x28] sm:$0xf]
    %v1122 = vld [vmem:[#allocation9 + $0x2c] sm:$0xf]
    %v1123 = vld [vmem:[#allocation9 + $0x30] sm:$0xf]
    %v1124 = vld [vmem:[#allocation9 + $0x34] sm:$0xf]
    %v1125 = vld [vmem:[#allocation9 + $0x38] sm:$0xf]
    %v1126 = vld [vmem:[#allocation9 + $0x3c] sm:$0xf]
    %v1127 = vld [vmem:[#allocation9 + $0x40] sm:$0xf]
    %v1128 = vld [vmem:[#allocation9 + $0x44] sm:$0xf]
    %v1129 = vld [vmem:[#allocation9 + $0x48] sm:$0xf]
    %v1130 = vld [vmem:[#allocation9 + $0x4c] sm:$0xf]
    %v1131 = vld [vmem:[#allocation9 + $0x50] sm:$0xf]
    %v1132 = vld [vmem:[#allocation9 + $0x54] sm:$0xf]
    %v1133 = vld [vmem:[#allocation9 + $0x58] sm:$0xf]
    %v1134 = vld [vmem:[#allocation9 + $0x5c] sm:$0xf]
    %v1135 = vld [vmem:[#allocation9 + $0x60] sm:$0xf]
    %v1136 = vld [vmem:[#allocation9 + $0x64] sm:$0xf]
    %v1137 = vld [vmem:[#allocation9 + $0x68] sm:$0xf]
    %v1138 = vld [vmem:[#allocation9 + $0x6c] sm:$0xf]
    %v1139 = vld [vmem:[#allocation9 + $0x70] sm:$0xf]
    %v1140 = vld [vmem:[#allocation9 + $0x74] sm:$0xf]
    %v1141 = vld [vmem:[#allocation9 + $0x78] sm:$0xf]
    %v1142 = vld [vmem:[#allocation9 + $0x7c] sm:$0xf]
    %v1143 = vld [vmem:[#allocation10] sm:$0x1]
    %v1145 = vperm.slane %v1143, 0
    %v1179 = vunpack.c.l.b16 %v1111
    %v1180 = vunpack.c.l.b16 %v1112
    %v1181 = vunpack.c.l.b16 %v1113
    %v1182 = vunpack.c.l.b16 %v1114
    %v1183 = vunpack.c.l.b16 %v1115
    %v1184 = vunpack.c.l.b16 %v1116
    %v1185 = vunpack.c.l.b16 %v1117
    %v1186 = vunpack.c.l.b16 %v1118
    %v1187 = vunpack.c.l.b16 %v1119
    %v1188 = vunpack.c.l.b16 %v1120
    %v1189 = vunpack.c.l.b16 %v1121
    %v1190 = vunpack.c.l.b16 %v1122
    %v1191 = vunpack.c.l.b16 %v1123
    %v1192 = vunpack.c.l.b16 %v1124
    %v1193 = vunpack.c.l.b16 %v1125
    %v1194 = vunpack.c.l.b16 %v1126
    %v1195 = vunpack.c.l.b16 %v1127
    %v1196 = vunpack.c.l.b16 %v1128
    %v1197 = vunpack.c.l.b16 %v1129
    %v1198 = vunpack.c.l.b16 %v1130
    %v1199 = vunpack.c.l.b16 %v1131
    %v1200 = vunpack.c.l.b16 %v1132
    %v1201 = vunpack.c.l.b16 %v1133
    %v1202 = vunpack.c.l.b16 %v1134
    %v1203 = vunpack.c.l.b16 %v1135
    %v1204 = vunpack.c.l.b16 %v1136
    %v1205 = vunpack.c.l.b16 %v1137
    %v1206 = vunpack.c.l.b16 %v1138
    %v1207 = vunpack.c.l.b16 %v1139
    %v1208 = vunpack.c.l.b16 %v1140
    %v1209 = vunpack.c.l.b16 %v1141
    %v1210 = vunpack.c.l.b16 %v1142
    %v1211 = vpack.c.b16 %v1180, %v1179
    %v1212 = vpack.c.b16 %v1182, %v1181
    %v1213 = vpack.c.b16 %v1184, %v1183
    %v1214 = vpack.c.b16 %v1186, %v1185
    %v1215 = vpack.c.b16 %v1188, %v1187
    %v1216 = vpack.c.b16 %v1190, %v1189
    %v1217 = vpack.c.b16 %v1192, %v1191
    %v1218 = vpack.c.b16 %v1194, %v1193
    %v1219 = vpack.c.b16 %v1196, %v1195
    %v1220 = vpack.c.b16 %v1198, %v1197
    %v1221 = vpack.c.b16 %v1200, %v1199
    %v1222 = vpack.c.b16 %v1202, %v1201
    %v1223 = vpack.c.b16 %v1204, %v1203
    %v1224 = vpack.c.b16 %v1206, %v1205
    %v1225 = vpack.c.b16 %v1208, %v1207
    %v1226 = vpack.c.b16 %v1210, %v1209
    %1243 = vmatpush.bf16.msra.mxu0 %v1218
    %1244 = vmatpush.bf16.msra.mxu0 %v1217
    %1245 = vmatpush.bf16.msra.mxu0 %v1216
    %1246 = vmatpush.bf16.msra.mxu0 %v1215
    %1247 = vmatpush.bf16.msra.mxu0 %v1214
    %1248 = vmatpush.bf16.msra.mxu0 %v1213
    %1249 = vmatpush.bf16.msra.mxu0 %v1212
    %1250 = vmatpush.bf16.msra.mxu0 %v1211
    %1251 = vmatmul.bf16.gmra.mxu0 %v1109
    %v1252 = vpop.f32.mrf.mxu0
    %v1253 = vadd.f32 %v1145, %v1252
    %v1254 = vpop.f32.mrf.mxu0
    %1255 = vdwg.mxu0
    %1256 = vmatpush.bf16.msra.mxu0 %v1226
    %1257 = vmatpush.bf16.msra.mxu0 %v1225
    %1258 = vmatpush.bf16.msra.mxu0 %v1224
    %1259 = vmatpush.bf16.msra.mxu0 %v1223
    %1260 = vmatpush.bf16.msra.mxu0 %v1222
    %1261 = vmatpush.bf16.msra.mxu0 %v1221
    %1262 = vmatpush.bf16.msra.mxu0 %v1220
    %1263 = vmatpush.bf16.msra.mxu0 %v1219
    %1264 = vmatmul.bf16.gmra.mxu0 %v1110
    %v1265 = vpop.f32.mrf.mxu0
    %v1266 = vadd.f32 %v1253, %v1265
    %v1267 = vpop.f32.mrf.mxu0
    %1268 = vdwg.mxu0
    %1269 = vadd.xlane.f32.xlu0 %v1266
    %v1270 = vpop.xlane.xlu0 %1269
    %v1271 = vmul.f32 %v1270, 0.01
    %v1272 = vmul.f32 %v1266, %v1266
    %1273 = vadd.xlane.f32.xlu0 %v1272
    %v1274 = vpop.xlane.xlu0 %1273
    %v1275 = vmul.f32 %v1274, 0.01
    %v1276 = vmul.f32 %v1271, %v1271
    %v1277 = vsub.f32 %v1275, %v1276
    %v1278 = vmax.f32 %v1277, 0.0
    %v1279 = vsub.f32 %v1266, %v1271
    %v1280 = vadd.f32 %v1278, 1e-05
    %v1281 = vrsqrt.pop %v1280
    %v1282 = vmul.f32 %v1281, %v1280
    %v1283 = vmul.f32 %v1282, %v1281
    %v1284 = vmul.f32 0.5, %v1283
    %v1285 = vsub.f32 1.5, %v1284
    %v1286 = vmul.f32 %v1281, %v1285
    %vm1287 = vweird.f32 %v1280
    %vm1288 = vweird.f32 %v1281
    %vm1289 = vmor %vm1287, %vm1288
    %v1290 = vsel %vm1289, %v1281, %v1286
    %v1291 = vmul.f32 %v1279, %v1290
    %v1292 = vld [vmem:[%s11] sm:$0x1]
    %v1294 = vperm.slane %v1292, 0
    %v1296 = vmul.f32 %v1291, %v1294
    %v1297 = vld [vmem:[#allocation12] sm:$0x1]
    %v1299 = vperm.slane %v1297, 0
    %v1301 = vadd.f32 %v1296, %v1299
    %v1302 = vmax.f32 %v1301, 0.0
    %v1303 = vpack.c.bf16 %v1302, %v1302
    %v1304 = vld [vmem:[#allocation13] sm:$0xf]
    %v1305 = vld [vmem:[#allocation13 + $0x4] sm:$0xf]
    %v1306 = vld [vmem:[#allocation13 + $0x8] sm:$0xf]
    %v1307 = vld [vmem:[#allocation13 + $0xc] sm:$0xf]
    %v1308 = vld [vmem:[#allocation13 + $0x10] sm:$0xf]
    %v1309 = vld [vmem:[#allocation13 + $0x14] sm:$0xf]
    %v1310 = vld [vmem:[#allocation13 + $0x18] sm:$0xf]
    %v1311 = vld [vmem:[#allocation13 + $0x1c] sm:$0xf]
    %v1312 = vld [vmem:[#allocation13 + $0x20] sm:$0xf]
    %v1313 = vld [vmem:[#allocation13 + $0x24] sm:$0xf]
    %v1314 = vld [vmem:[#allocation13 + $0x28] sm:$0xf]
    %v1315 = vld [vmem:[#allocation13 + $0x2c] sm:$0xf]
    %v1316 = vld [vmem:[#allocation13 + $0x30] sm:$0xf]
    %v1317 = vld [vmem:[#allocation13 + $0x34] sm:$0xf]
    %v1318 = vld [vmem:[#allocation13 + $0x38] sm:$0xf]
    %v1319 = vld [vmem:[#allocation13 + $0x3c] sm:$0xf]
    %v1320 = vld [vmem:[#allocation15] sm:$0x1]
    %v1322 = vperm.slane %v1320, 0
    %v1340 = vunpack.c.l.b16 %v1304
    %v1341 = vunpack.c.l.b16 %v1305
    %v1342 = vunpack.c.l.b16 %v1306
    %v1343 = vunpack.c.l.b16 %v1307
    %v1344 = vunpack.c.l.b16 %v1308
    %v1345 = vunpack.c.l.b16 %v1309
    %v1346 = vunpack.c.l.b16 %v1310
    %v1347 = vunpack.c.l.b16 %v1311
    %v1348 = vunpack.c.l.b16 %v1312
    %v1349 = vunpack.c.l.b16 %v1313
    %v1350 = vunpack.c.l.b16 %v1314
    %v1351 = vunpack.c.l.b16 %v1315
    %v1352 = vunpack.c.l.b16 %v1316
    %v1353 = vunpack.c.l.b16 %v1317
    %v1354 = vunpack.c.l.b16 %v1318
    %v1355 = vunpack.c.l.b16 %v1319
    %v1356 = vpack.c.b16 %v1341, %v1340
    %v1357 = vpack.c.b16 %v1343, %v1342
    %v1358 = vpack.c.b16 %v1345, %v1344
    %v1359 = vpack.c.b16 %v1347, %v1346
    %v1360 = vpack.c.b16 %v1349, %v1348
    %v1361 = vpack.c.b16 %v1351, %v1350
    %v1362 = vpack.c.b16 %v1353, %v1352
    %v1363 = vpack.c.b16 %v1355, %v1354
    %1372 = vmatpush.bf16.msra.mxu0 %v1363
    %1373 = vmatpush.bf16.msra.mxu0 %v1362
    %1374 = vmatpush.bf16.msra.mxu0 %v1361
    %1375 = vmatpush.bf16.msra.mxu0 %v1360
    %1376 = vmatpush.bf16.msra.mxu0 %v1359
    %1377 = vmatpush.bf16.msra.mxu0 %v1358
    %1378 = vmatpush.bf16.msra.mxu0 %v1357
    %1379 = vmatpush.bf16.msra.mxu0 %v1356
    %1380 = vmatmul.bf16.gmra.mxu0 %v1303
    %v1381 = vpop.f32.mrf.mxu0
    %v1382 = vadd.f32 %v1322, %v1381
    %v1383 = vpop.f32.mrf.mxu0
    %1384 = vdwg.mxu0
    %v1385 = vxor.u32 %v1382, 2147483648
    %v1386 = vmul.f32 %v1385, 1.442695
    %v1387 = vpow.pop %v1386
    %v1388 = vadd.f32 %v1387, 1.0
    %v1389 = vrcp.pop %v1388
    %v1390 = vmul.f32 %v1388, %v1389
    %v1391 = vsub.f32 1.0, %v1390
    %v1392 = vmul.f32 %v1389, %v1391
    %v1393 = vadd.f32 %v1389, %v1392
    %vm1394 = vweird.f32 %v1388
    %vm1395 = vweird.f32 %v1389
    %vm1396 = vmor %vm1394, %vm1395
    %v1397 = vsel %vm1396, %v1389, %v1393
    %v1398 = vand.u32 2147483647, %v1388
    %vm1399 = vcmp.eq.f32.partialorder %v1398, 8.507059e+37
    %v1400 = vand.u32 %v1388, 2147483648
    %v1401 = vor.u32 1.1754944e-38, %v1400
    %v1402 = vsel %vm1399, %v1401, %v1397
    %v1403 = vmul.f32 1.0, %v1402
    %v1404 = vpack.c.bf16 %v1403, %v1403
    %1405 = vst [vmem:[%s15] sm:$0xf] %v1404
    // Predicated region
    $region98: #{generator_forward.1} parent=1 // pred_check
      _
    $region99: #{generator_forward.1} parent=1 // pred_check_branch
      %1407 = sbr.rel (0) target = $region101
    $region100: #{generator_forward.1} parent=1 // pred_region
      _
    $region101: #{generator_forward.1} parent=1 // pred_fallthru
      _
    // Predicated region
    $region102: #{generator_forward.1} parent=1 // pred_check
      _
    $region103: #{generator_forward.1} parent=1 // pred_check_branch
      %1409 = sbr.rel (0) target = $region105
    $region104: #{generator_forward.1} parent=1 // pred_region
      _
    $region105: #{generator_forward.1} parent=1 // pred_fallthru
      _
    %1410 = vsyncpa [#allocation3], 1
    %1411 = vsyncpa [#allocation5], 1
    %1412 = vsyncpa [#allocation8], 1
    %1413 = vsyncpa [#allocation11], 1
    %1414 = vsyncpa [#allocation14], 1

</llo_original>
